<compile_context>
chip_gen: v6e
topology: v6e:2x2x1
jax: 0.10.0
libtpu: 0.0.40
codegen_flags: <defaults>
</compile_context>

<pallas_src>
import functools

import jax
import jax.numpy as jnp
from jax import lax
from jax.experimental import pallas as pl
from jax.experimental.pallas import tpu as pltpu


def _vmem_limit(block_bytes, transient_bytes):
    """Scoped-VMEM limit sized from the actual block shapes, capped at v7x's 64 MiB."""
    need = 2 * block_bytes + transient_bytes + (2 << 20)
    return int(min(max(need, 32 << 20), 64 << 20))


def _pick_tq(n):
    """Query tile: 256 fills the 256-wide MXU on v6e/v7x; 128 on 128-wide chips."""
    kind = ""
    try:
        kind = jax.devices()[0].device_kind.lower()
    except Exception:
        pass
    narrow_mxu = any(tag in kind for tag in ("v2", "v3", "v4", "v5"))
    for t in ((128, 256) if narrow_mxu else (256, 128)):
        if n >= t and n % t == 0:
            return t
    return n


# --------------------------------------------------------------------------
# Attention kernel (query-row tiled)
# --------------------------------------------------------------------------

def _attn_kernel(scal_ref, gx_ref, xk_ref, v_ref, xq_ref, preq_ref, mask_ref,
                 out_ref, attn_ref, ctx_ref):
    """One (batch, query-tile) step: energy strip, softmax, fused value matmul,
    gamma residual and masked context-flow combine."""
    c = xq_ref.shape[1]
    gxq = gx_ref[0]                       # (C, TQ)  bf16  = (Wq^T Wq) x_query (precomputed)
    xk = xk_ref[0]                        # (C, N)   bf16  keys
    v = v_ref[0]                          # (2C, N)  bf16  [x; pre] values (precomputed)

    # energy[i, j] = x_qi^T (Wq^T Wq) x_j ; bf16 MXU operands, f32 accumulation.
    energy = lax.dot_general(gxq, xk, (((0,), (0,)), ((), ())),
                             preferred_element_type=jnp.float32)       # (TQ, N)

    # softmax (f32), EUP reciprocal for the normalization
    e_max = jnp.max(energy, axis=-1, keepdims=True)
    p = jnp.exp(energy - e_max)
    inv = pl.reciprocal(jnp.sum(p, axis=-1, keepdims=True), approx=True)
    attn = p * inv                                                      # (TQ, N) f32
    attn_b = attn.astype(jnp.bfloat16)
    attn_ref[0] = attn_b                  # bf16 write: halves the (B,N,N) HBM traffic

    # One MXU contraction for both the self-attention value (x) and the context
    # flow (pre): fused[ch, i] = sum_j [x; pre][ch, j] * attn[i, j]
    fused = lax.dot_general(v, attn_b, (((1,), (1,)), ((), ())),
                            preferred_element_type=jnp.float32)         # (2C, TQ)

    gamma = scal_ref[0]
    alpha = scal_ref[1]
    out_ref[0] = gamma * fused[:c] + xq_ref[0]

    m = mask_ref[0]                       # (1, TQ)
    am = alpha * (1.0 - m)                # hoisted epilogue factor
    ctx_ref[0] = am * fused[c:] + m * preq_ref[0]


def _attn_pallas(scal, gx, xk_b, v_b, x_f, pre_f, mask_f, tq):
    b, c, n = x_f.shape
    n_qt = n // tq
    block_bytes = (c * tq * 2 + c * n * 2 + 2 * c * n * 2 + c * tq * 4
                   + c * tq * 4 + tq * 4 + c * tq * 4 + tq * n * 2 + c * tq * 4)
    transient = tq * n * (4 + 4 + 4 + 2) + 2 * c * tq * 4
    return pl.pallas_call(
        _attn_kernel,
        out_shape=(jax.ShapeDtypeStruct((b, c, n), jnp.float32),
                   jax.ShapeDtypeStruct((b, n, n), jnp.bfloat16),
                   jax.ShapeDtypeStruct((b, c, n), jnp.float32)),
        grid=(b, n_qt),
        in_specs=[
            pl.BlockSpec(memory_space=pltpu.MemorySpace.SMEM),      # [gamma, alpha]
            pl.BlockSpec((1, c, tq), lambda i, j: (i, 0, j)),       # Gx query strip (bf16)
            pl.BlockSpec((1, c, n), lambda i, j: (i, 0, 0)),        # x keys (bf16, full)
            pl.BlockSpec((1, 2 * c, n), lambda i, j: (i, 0, 0)),    # [x; pre] values (bf16)
            pl.BlockSpec((1, c, tq), lambda i, j: (i, 0, j)),       # x query strip (f32)
            pl.BlockSpec((1, c, tq), lambda i, j: (i, 0, j)),       # pre query strip (f32)
            pl.BlockSpec((1, 1, tq), lambda i, j: (i, 0, j)),       # mask strip
        ],
        out_specs=(
            pl.BlockSpec((1, c, tq), lambda i, j: (i, 0, j)),       # out strip
            pl.BlockSpec((1, tq, n), lambda i, j: (i, j, 0)),       # attn strip (bf16)
            pl.BlockSpec((1, c, tq), lambda i, j: (i, 0, j)),       # ctx strip
        ),
        compiler_params=pltpu.CompilerParams(
            dimension_semantics=("parallel", "parallel"),
            vmem_limit_bytes=_vmem_limit(block_bytes, transient)),
    )(scal, gx, xk_b, v_b, x_f, pre_f, mask_f)


# --------------------------------------------------------------------------
# ResBlock kernels: fused-tap 3x3 convs on flattened maps (roll-based taps)
# --------------------------------------------------------------------------

def _conv_taps(h, h_img, w_img):
    """9 shifted copies of the flattened (C, N) map h, tap order
    k = (dy+1)*3 + (dx+1).  Shifts use pltpu.roll (XLU slot, no VMEM copies);
    circular wrap is neutralized by zeroing the invalid SOURCE columns / rows
    before the roll (row H-1 for dy=-1, row 0 for dy=+1, col W-1 for dx=-1,
    col 0 for dx=+1)."""
    n = h_img * w_img
    idx = lax.broadcasted_iota(jnp.int32, (1, n), 1)
    col = idx % w_img
    col_keep = {-1: col != (w_img - 1), 0: None, 1: col != 0}
    row_keep = {-1: idx < (n - w_img), 0: None, 1: idx >= w_img}

    pieces = []
    for dy in (-1, 0, 1):
        rk = row_keep[dy]
        for dx in (-1, 0, 1):
            ck = col_keep[dx]
            if rk is None and ck is None:
                keep = None
            elif rk is None:
                keep = ck
            elif ck is None:
                keep = rk
            else:
                keep = rk & ck
            src = h if keep is None else jnp.where(keep, h, 0.0)
            s = dy * w_img + dx                       # out[:, p] = h[:, p + s]
            pieces.append(pltpu.roll(src, shift=(-s) % n, axis=1) if s else src)
    return pieces


def _res_stage1_kernel(a_ref, c_ref, sh_ref, w_ref, h1_ref, st_ref, *, h_img, w_img):
    """BN1 (scale folded into w, shift = -mu) -> LeakyReLU(0.01) -> conv3x3 over the
    implicit concat [out, context_flow], as a single (C, 18C) x (18C, N) MXU op.
    Also emits per-channel sum / sum-of-squares of h1 for the BN2 statistics."""
    c = a_ref.shape[1]
    sh = sh_ref[...]                                     # (2C, 1)
    ha = a_ref[0] + sh[:c]
    hc = c_ref[0] + sh[c:]
    ha = jnp.where(ha >= 0, ha, 0.01 * ha).astype(jnp.bfloat16)
    hc = jnp.where(hc >= 0, hc, 0.01 * hc).astype(jnp.bfloat16)

    pieces = _conv_taps(ha, h_img, w_img) + _conv_taps(hc, h_img, w_img)
    buf = jnp.concatenate(pieces, axis=0)                # (18C, N) bf16
    h1 = jnp.dot(w_ref[...], buf, preferred_element_type=jnp.float32)   # (C, N) f32
    h1_ref[0] = h1.astype(jnp.bfloat16)

    s = jnp.sum(h1, axis=1, keepdims=True)               # (C, 1)
    ss = jnp.sum(h1 * h1, axis=1, keepdims=True)         # (C, 1)
    st_ref[0] = jnp.concatenate([s, ss], axis=1)         # (C, 2)


def _res_stage2_kernel(h1_ref, a_ref, c_ref, sh_ref, w_ref, o_ref, *, h_img, w_img):
    """BN2 -> LeakyReLU -> conv3x3, with the 1x1 spectral-norm shortcut fused into
    the SAME matmul (extra 2C rows in the im2col buffer)."""
    h = h1_ref[0].astype(jnp.float32) + sh_ref[...]      # shift = -mu2, (C, 1)
    h = jnp.where(h >= 0, h, 0.01 * h).astype(jnp.bfloat16)

    pieces = _conv_taps(h, h_img, w_img)
    pieces.append(a_ref[0].astype(jnp.bfloat16))         # shortcut operand: out half
    pieces.append(c_ref[0].astype(jnp.bfloat16))         # shortcut operand: ctx half
    buf = jnp.concatenate(pieces, axis=0)                # (11C, N) bf16
    o_ref[0] = jnp.dot(w_ref[...], buf, preferred_element_type=jnp.float32)


def _res_stage1_pallas(a, cflow, shift1, w1p, h_img, w_img):
    b, c, n = a.shape
    kernel = functools.partial(_res_stage1_kernel, h_img=h_img, w_img=w_img)
    block_bytes = 2 * c * n * 4 + 2 * c * 4 + c * 18 * c * 2 + c * n * 2 + c * 2 * 4
    transient = 2 * 18 * c * n * 2 + 4 * c * n * 4
    return pl.pallas_call(
        kernel,
        out_shape=(jax.ShapeDtypeStruct((b, c, n), jnp.bfloat16),
                   jax.ShapeDtypeStruct((b, c, 2), jnp.float32)),
        grid=(b,),
        in_specs=[pl.BlockSpec((1, c, n), lambda i: (i, 0, 0)),
                  pl.BlockSpec((1, c, n), lambda i: (i, 0, 0)),
                  pl.BlockSpec((2 * c, 1), lambda i: (0, 0)),
                  pl.BlockSpec((c, 18 * c), lambda i: (0, 0))],
        out_specs=(pl.BlockSpec((1, c, n), lambda i: (i, 0, 0)),
                   pl.BlockSpec((1, c, 2), lambda i: (i, 0, 0))),
        compiler_params=pltpu.CompilerParams(
            dimension_semantics=("parallel",),
            vmem_limit_bytes=_vmem_limit(block_bytes, transient)),
    )(a, cflow, shift1, w1p)


def _res_stage2_pallas(h1, a, cflow, shift2, w2all, h_img, w_img):
    b, c, n = h1.shape
    kernel = functools.partial(_res_stage2_kernel, h_img=h_img, w_img=w_img)
    block_bytes = c * n * 2 + 2 * c * n * 4 + c * 4 + c * 11 * c * 2 + c * n * 4
    transient = 2 * 11 * c * n * 2 + 4 * c * n * 4
    return pl.pallas_call(
        kernel,
        out_shape=jax.ShapeDtypeStruct((b, c, n), jnp.float32),
        grid=(b,),
        in_specs=[pl.BlockSpec((1, c, n), lambda i: (i, 0, 0)),
                  pl.BlockSpec((1, c, n), lambda i: (i, 0, 0)),
                  pl.BlockSpec((1, c, n), lambda i: (i, 0, 0)),
                  pl.BlockSpec((c, 1), lambda i: (0, 0)),
                  pl.BlockSpec((c, 11 * c), lambda i: (0, 0))],
        out_specs=pl.BlockSpec((1, c, n), lambda i: (i, 0, 0)),
        compiler_params=pltpu.CompilerParams(
            dimension_semantics=("parallel",),
            vmem_limit_bytes=_vmem_limit(block_bytes, transient)),
    )(h1, a, cflow, shift2, w2all)


# --------------------------------------------------------------------------
# Parameters and JAX glue (spectral norm / cross-batch BN stats / weight packing)
# --------------------------------------------------------------------------

def _l2normalize(v, eps=1e-12):
    return v / (jnp.linalg.norm(v) + eps)


def _spectral_norm_weight(w, u):
    """One power iteration (as SpectralNorm.forward does), then w / sigma."""
    height = w.shape[0]
    wm = w.reshape(height, -1)
    v = _l2normalize(wm.T @ u)
    u = _l2normalize(wm @ v)
    sigma = u @ (wm @ v)
    return w / sigma


def _bn_stats(t_flat):
    """Training-mode BatchNorm2d stats (weight=1, bias=0, eps=1e-5) per channel.
    t_flat: (B, C, N) -> (scale, -mean)."""
    mu = jnp.mean(t_flat, axis=(0, 2))
    var = jnp.var(t_flat, axis=(0, 2))
    return 1.0 / jnp.sqrt(var + 1e-5), -mu


def _pack_taps(w):
    """(O, I, 3, 3) -> (O, 9*I), column = (ky*3+kx)*I + i (matches _conv_taps)."""
    o, i = w.shape[0], w.shape[1]
    return jnp.transpose(w, (0, 2, 3, 1)).reshape(o, 9 * i)


def init_params(key, input_nc):
    c = input_nc
    ks = jax.random.split(key, 8)
    p = {}
    p['wq'] = 0.1 * jax.random.normal(ks[0], (c // 4, c, 1, 1), jnp.float32)
    # PyTorch initializes gamma/alpha to zero; small nonzero values exercise the paths.
    p['gamma'] = jnp.asarray(0.1, jnp.float32)
    p['alpha'] = jnp.asarray(0.2, jnp.float32)
    # ResBlock(2C -> C, hidden C), all three convs spectral-normalized.
    p['w1'] = 0.1 * jax.random.normal(ks[1], (c, 2 * c, 3, 3), jnp.float32)
    p['w2'] = 0.1 * jax.random.normal(ks[2], (c, c, 3, 3), jnp.float32)
    p['ws'] = 0.1 * jax.random.normal(ks[3], (c, 2 * c, 1, 1), jnp.float32)
    p['u1'] = _l2normalize(jax.random.normal(ks[4], (c,), jnp.float32))
    p['u2'] = _l2normalize(jax.random.normal(ks[5], (c,), jnp.float32))
    p['us'] = _l2normalize(jax.random.normal(ks[6], (c,), jnp.float32))
    return p


def auto_attn_forward(params, x, pre=None, mask=None):
    b, c, h_img, w_img = x.shape
    n = h_img * w_img
    x_f = x.reshape(b, c, n).astype(jnp.float32)
    if pre is None:
        pre_f = jnp.zeros_like(x_f)
        mask_f = jnp.zeros((b, 1, n), jnp.float32)
    else:
        pre_f = pre.reshape(b, c, n).astype(jnp.float32)
        mask_f = mask.reshape(b, 1, n).astype(jnp.float32)

    # Gram matrix of the 1x1 query conv folded in: energy = x^T (Wq^T Wq) x.
    wq2d = params['wq'].reshape(c // 4, c)
    gram = jnp.dot(wq2d.T, wq2d, precision=lax.Precision.HIGHEST)
    # Hoisted per-batch projection Gx (one big XLA matmul), fed to the kernel in bf16.
    gx = jnp.einsum('cd,bdn->bcn', gram, x_f,
                    precision=lax.Precision.HIGHEST).astype(jnp.bfloat16)
    # bf16 key / [x; pre] value matrices built once (no per-strip concat+cast).
    xk_b = x_f.astype(jnp.bfloat16)
    v_b = jnp.concatenate([x_f, pre_f], axis=1).astype(jnp.bfloat16)

    scal = jnp.stack([params['gamma'], params['alpha']]).astype(jnp.float32)
    tq = _pick_tq(n)

    out_f, attn, ctx_f = _attn_pallas(scal, gx, xk_b, v_b, x_f, pre_f, mask_f, tq)
    if pre is None:
        # attn is returned in bf16 (deliberate HBM-traffic trade-off).
        return out_f.reshape(b, c, h_img, w_img), attn

    # ---- ResBlock(cat([out, context_flow], 1)), without materializing the concat.
    w1 = _spectral_norm_weight(params['w1'], params['u1'])     # (C, 2C, 3, 3)
    w2 = _spectral_norm_weight(params['w2'], params['u2'])     # (C, C, 3, 3)
    ws = _spectral_norm_weight(params['ws'], params['us']).reshape(c, 2 * c)

    # BN1 stats (cross-batch, training mode); scale folded into conv1 weights
    # (valid through LeakyReLU because scale = 1/sqrt(var+eps) > 0).
    s_a, nm_a = _bn_stats(out_f)
    s_c, nm_c = _bn_stats(ctx_f)
    s1 = jnp.concatenate([s_a, s_c])                            # (2C,)
    shift1 = jnp.concatenate([nm_a, nm_c])[:, None]             # (2C, 1)
    w1s = w1 * s1[None, :, None, None]
    w1p = jnp.concatenate([_pack_taps(w1s[:, :c]), _pack_taps(w1s[:, c:])],
                          axis=1).astype(jnp.bfloat16)          # (C, 18C)

    h1, st = _res_stage1_pallas(out_f, ctx_f, shift1, w1p, h_img, w_img)

    # BN2 stats from the (B, C, 2) per-batch channel sums emitted by stage 1
    # (no extra full HBM read of h1).
    cnt = float(b * n)
    mu2 = jnp.sum(st[..., 0], axis=0) / cnt
    ex2 = jnp.sum(st[..., 1], axis=0) / cnt
    var2 = jnp.maximum(ex2 - mu2 * mu2, 0.0)
    s2 = 1.0 / jnp.sqrt(var2 + 1e-5)
    shift2 = (-mu2)[:, None]                                    # (C, 1)
    w2s = w2 * s2[None, :, None, None]
    # conv2 taps + the two halves of the 1x1 shortcut, fused into one weight matrix.
    w2all = jnp.concatenate([_pack_taps(w2s), ws[:, :c], ws[:, c:]],
                            axis=1).astype(jnp.bfloat16)        # (C, 11C)

    out_res = _res_stage2_pallas(h1, out_f, ctx_f, shift2, w2all, h_img, w_img)
    return out_res.reshape(b, c, h_img, w_img), attn


# --------------------------------------------------------------------------
# Pure-JAX reference (for correctness checking only)
# --------------------------------------------------------------------------

def _conv_ref(x, w, pad):
    return lax.conv_general_dilated(
        x, w, window_strides=(1, 1), padding=pad,
        dimension_numbers=('NCHW', 'OIHW', 'NCHW'),
        precision=lax.Precision.HIGHEST)


def auto_attn_reference(params, x, pre=None, mask=None):
    b, c, h_img, w_img = x.shape
    n = h_img * w_img
    q = _conv_ref(x, params['wq'], [(0, 0), (0, 0)]).reshape(b, -1, n)
    energy = jnp.einsum('bci,bcj->bij', q, q, precision=lax.Precision.HIGHEST)
    attn = jax.nn.softmax(energy, axis=-1)
    v = x.reshape(b, c, n)
    out = jnp.einsum('bcj,bij->bci', v, attn, precision=lax.Precision.HIGHEST)
    out = (params['gamma'] * out + v).reshape(b, c, h_img, w_img)
    if pre is None:
        return out, attn
    ctx = jnp.einsum('bcj,bij->bci', pre.reshape(b, c, n), attn,
                     precision=lax.Precision.HIGHEST).reshape(b, c, h_img, w_img)
    ctx = params['alpha'] * (1.0 - mask) * ctx + mask * pre
    y = jnp.concatenate([out, ctx], axis=1)
    w1 = _spectral_norm_weight(params['w1'], params['u1'])
    w2 = _spectral_norm_weight(params['w2'], params['u2'])
    ws = _spectral_norm_weight(params['ws'], params['us'])

    def bn(t):
        mu = jnp.mean(t, axis=(0, 2, 3), keepdims=True)
        var = jnp.var(t, axis=(0, 2, 3), keepdims=True)
        return (t - mu) / jnp.sqrt(var + 1e-5)

    def lrelu(t):
        return jnp.where(t >= 0, t, 0.01 * t)

    h = _conv_ref(lrelu(bn(y)), w1, [(1, 1), (1, 1)])
    h = _conv_ref(lrelu(bn(h)), w2, [(1, 1), (1, 1)])
    sc = _conv_ref(y, ws, [(0, 0), (0, 0)])
    return h + sc, attn


# --------------------------------------------------------------------------

if __name__ == "__main__":
    key = jax.random.PRNGKey(0)
    k_x, k_pre, k_mask, k_p = jax.random.split(key, 4)

    B, C, H, W = 2, 8, 16, 16          # input_nc = 8, N = 256
    x = jax.random.normal(k_x, (B, C, H, W), jnp.float32)
    pre = jax.random.normal(k_pre, (B, C, H, W), jnp.float32)
    mask = (jax.random.uniform(k_mask, (B, 1, H, W)) > 0.5).astype(jnp.float32)
    params = init_params(k_p, C)

    out, attn = auto_attn_forward(params, x, pre, mask)
    out = jax.block_until_ready(out)
    attn = jax.block_until_ready(attn)

    out_ref, attn_ref = auto_attn_reference(params, x, pre, mask)

    assert out.shape == (B, C, H, W)
    assert attn.shape == (B, H * W, H * W)
    # attn is stored in bf16 (deliberate HBM-traffic trade-off) and its softmax
    # uses an approximate EUP reciprocal -> slightly looser tolerance.
    attn_f32 = attn.astype(jnp.float32)
    assert bool(jnp.allclose(attn_f32, attn_ref, atol=5e-3, rtol=5e-3)), (
        "attention mismatch, max abs diff = %g"
        % float(jnp.max(jnp.abs(attn_f32 - attn_ref))))
    # bf16 MXU operands + bf16 h1 storage in the conv stages -> looser tolerance.
    assert bool(jnp.allclose(out, out_ref, atol=4e-2, rtol=4e-2)), (
        "output mismatch, max abs diff = %g"
        % float(jnp.max(jnp.abs(out - out_ref))))

    print("KERNEL_OK")
</pallas_src>

<mosaic_0001>
module attributes {stable_mosaic.version = 11 : i64} {
  func.func @_attn_kernel(%arg0: i32, %arg1: i32, %arg2: memref<2xf32, #tpu.memory_space<smem>>, %arg3: memref<1x8x256xbf16, #tpu.memory_space<vmem>>, %arg4: memref<1x8x256xbf16, #tpu.memory_space<vmem>>, %arg5: memref<1x16x256xbf16, #tpu.memory_space<vmem>>, %arg6: memref<1x8x256xf32, #tpu.memory_space<vmem>>, %arg7: memref<1x8x256xf32, #tpu.memory_space<vmem>>, %arg8: memref<1x1x256xf32, #tpu.memory_space<vmem>>, %arg9: memref<1x8x256xf32, #tpu.memory_space<vmem>>, %arg10: memref<1x256x256xbf16, #tpu.memory_space<vmem>>, %arg11: memref<1x8x256xf32, #tpu.memory_space<vmem>>) attributes {dimension_semantics = [#tpu.dimension_semantics<parallel>, #tpu.dimension_semantics<parallel>], iteration_bounds = array<i64: 2, 1>, scalar_prefetch = 0 : i64, scratch_operands = 0 : i64, tpu.core_type = #tpu.core_type<tc>, window_params = [{transform_indices = @transform_0, window_bounds = array<i64: 2>}, {transform_indices = @transform_1, window_bounds = array<i64: 1, 8, 256>}, {transform_indices = @transform_2, window_bounds = array<i64: 1, 8, 256>}, {transform_indices = @transform_3, window_bounds = array<i64: 1, 16, 256>}, {transform_indices = @transform_4, window_bounds = array<i64: 1, 8, 256>}, {transform_indices = @transform_5, window_bounds = array<i64: 1, 8, 256>}, {transform_indices = @transform_6, window_bounds = array<i64: 1, 1, 256>}, {transform_indices = @transform_7, window_bounds = array<i64: 1, 8, 256>}, {transform_indices = @transform_8, window_bounds = array<i64: 1, 256, 256>}, {transform_indices = @transform_9, window_bounds = array<i64: 1, 8, 256>}]} {
    %c0 = arith.constant 0 : index
    %c0_0 = arith.constant 0 : index
    %c0_1 = arith.constant 0 : index
    %0 = vector.load %arg3[%c0, %c0_0, %c0_1] : memref<1x8x256xbf16, #tpu.memory_space<vmem>>, vector<1x8x256xbf16>
    %1 = vector.shape_cast %0 : vector<1x8x256xbf16> to vector<8x256xbf16>
    %c0_2 = arith.constant 0 : index
    %c0_3 = arith.constant 0 : index
    %c0_4 = arith.constant 0 : index
    %2 = vector.load %arg4[%c0_2, %c0_3, %c0_4] : memref<1x8x256xbf16, #tpu.memory_space<vmem>>, vector<1x8x256xbf16>
    %3 = vector.shape_cast %2 : vector<1x8x256xbf16> to vector<8x256xbf16>
    %c0_5 = arith.constant 0 : index
    %c0_6 = arith.constant 0 : index
    %c0_7 = arith.constant 0 : index
    %4 = vector.load %arg5[%c0_5, %c0_6, %c0_7] : memref<1x16x256xbf16, #tpu.memory_space<vmem>>, vector<1x16x256xbf16>
    %5 = vector.shape_cast %4 : vector<1x16x256xbf16> to vector<16x256xbf16>
    %cst = arith.constant dense<0.000000e+00> : vector<256x256xf32>
    %6 = tpu.matmul %1, %3, %cst {dimension_numbers = #tpu.dot_dimension_numbers<[0], [0], [1], [1], [0, 1, 1, 1], [], []>} : vector<8x256xbf16>, vector<8x256xbf16>, vector<256x256xf32> -> vector<256x256xf32>
    %cst_8 = arith.constant dense<0xFF800000> : vector<256xf32>
    %7 = vector.multi_reduction <maximumf>, %6, %cst_8 [1] : vector<256x256xf32> to vector<256xf32>
    %8 = vector.shape_cast %7 : vector<256xf32> to vector<256x1xf32>
    %9 = vector.broadcast %8 : vector<256x1xf32> to vector<256x256xf32>
    %10 = arith.subf %6, %9 : vector<256x256xf32>
    %11 = math.exp %10 : vector<256x256xf32>
    %cst_9 = arith.constant dense<0.000000e+00> : vector<256xf32>
    %12 = vector.multi_reduction <add>, %11, %cst_9 [1] : vector<256x256xf32> to vector<256xf32>
    %13 = vector.shape_cast %12 : vector<256xf32> to vector<256x1xf32>
    %14 = tpu.reciprocal %13 {approx = true} : vector<256x1xf32> -> vector<256x1xf32>
    %15 = vector.broadcast %14 : vector<256x1xf32> to vector<256x256xf32>
    %16 = arith.mulf %11, %15 : vector<256x256xf32>
    %17 = arith.truncf %16 : vector<256x256xf32> to vector<256x256xbf16>
    %c0_10 = arith.constant 0 : index
    %c0_11 = arith.constant 0 : index
    %c0_12 = arith.constant 0 : index
    %18 = vector.load %arg10[%c0_10, %c0_11, %c0_12] : memref<1x256x256xbf16, #tpu.memory_space<vmem>>, vector<1x256x256xbf16>
    %19 = vector.shape_cast %18 : vector<1x256x256xbf16> to vector<256x256xbf16>
    %20 = vector.shape_cast %17 : vector<256x256xbf16> to vector<1x256x256xbf16>
    tpu.vector_store %arg10[%c0_10, %c0_11, %c0_12], %20 {strides = array<i32>} : memref<1x256x256xbf16, #tpu.memory_space<vmem>>, vector<1x256x256xbf16>,
    %cst_13 = arith.constant dense<0.000000e+00> : vector<16x256xf32>
    %21 = tpu.matmul %5, %17, %cst_13 {dimension_numbers = #tpu.dot_dimension_numbers<[1], [1], [0], [0], [0, 0, 1, 0], [], []>} : vector<16x256xbf16>, vector<256x256xbf16>, vector<16x256xf32> -> vector<16x256xf32>
    %c0_14 = arith.constant 0 : index
    %22 = memref.load %arg2[%c0_14] : memref<2xf32, #tpu.memory_space<smem>>
    %c1 = arith.constant 1 : index
    %23 = memref.load %arg2[%c1] : memref<2xf32, #tpu.memory_space<smem>>
    %24 = vector.extract_strided_slice %21 {offsets = [0, 0], sizes = [8, 256], strides = [1, 1]} : vector<16x256xf32> to vector<8x256xf32>
    %25 = vector.broadcast %22 : f32 to vector<8x256xf32>
    %26 = arith.mulf %25, %24 : vector<8x256xf32>
    %c0_15 = arith.constant 0 : index
    %c0_16 = arith.constant 0 : index
    %c0_17 = arith.constant 0 : index
    %27 = vector.load %arg6[%c0_15, %c0_16, %c0_17] : memref<1x8x256xf32, #tpu.memory_space<vmem>>, vector<1x8x256xf32>
    %28 = vector.shape_cast %27 : vector<1x8x256xf32> to vector<8x256xf32>
    %29 = arith.addf %26, %28 : vector<8x256xf32>
    %c0_18 = arith.constant 0 : index
    %c0_19 = arith.constant 0 : index
    %c0_20 = arith.constant 0 : index
    %30 = vector.load %arg9[%c0_18, %c0_19, %c0_20] : memref<1x8x256xf32, #tpu.memory_space<vmem>>, vector<1x8x256xf32>
    %31 = vector.shape_cast %30 : vector<1x8x256xf32> to vector<8x256xf32>
    %32 = vector.shape_cast %29 : vector<8x256xf32> to vector<1x8x256xf32>
    tpu.vector_store %arg9[%c0_18, %c0_19, %c0_20], %32 {strides = array<i32>} : memref<1x8x256xf32, #tpu.memory_space<vmem>>, vector<1x8x256xf32>,
    %c0_21 = arith.constant 0 : index
    %c0_22 = arith.constant 0 : index
    %c0_23 = arith.constant 0 : index
    %33 = vector.load %arg8[%c0_21, %c0_22, %c0_23] : memref<1x1x256xf32, #tpu.memory_space<vmem>>, vector<1x1x256xf32>
    %34 = vector.shape_cast %33 : vector<1x1x256xf32> to vector<1x256xf32>
    %cst_24 = arith.constant 1.000000e+00 : f32
    %35 = vector.broadcast %cst_24 : f32 to vector<1x256xf32>
    %36 = arith.subf %35, %34 : vector<1x256xf32>
    %37 = vector.broadcast %23 : f32 to vector<1x256xf32>
    %38 = arith.mulf %37, %36 : vector<1x256xf32>
    %39 = vector.extract_strided_slice %21 {offsets = [8, 0], sizes = [8, 256], strides = [1, 1]} : vector<16x256xf32> to vector<8x256xf32>
    %40 = vector.broadcast %38 : vector<1x256xf32> to vector<8x256xf32>
    %41 = arith.mulf %40, %39 : vector<8x256xf32>
    %c0_25 = arith.constant 0 : index
    %c0_26 = arith.constant 0 : index
    %c0_27 = arith.constant 0 : index
    %42 = vector.load %arg7[%c0_25, %c0_26, %c0_27] : memref<1x8x256xf32, #tpu.memory_space<vmem>>, vector<1x8x256xf32>
    %43 = vector.shape_cast %42 : vector<1x8x256xf32> to vector<8x256xf32>
    %44 = vector.broadcast %34 : vector<1x256xf32> to vector<8x256xf32>
    %45 = arith.mulf %44, %43 : vector<8x256xf32>
    %46 = arith.addf %41, %45 : vector<8x256xf32>
    %c0_28 = arith.constant 0 : index
    %c0_29 = arith.constant 0 : index
    %c0_30 = arith.constant 0 : index
    %47 = vector.load %arg11[%c0_28, %c0_29, %c0_30] : memref<1x8x256xf32, #tpu.memory_space<vmem>>, vector<1x8x256xf32>
    %48 = vector.shape_cast %47 : vector<1x8x256xf32> to vector<8x256xf32>
    %49 = vector.shape_cast %46 : vector<8x256xf32> to vector<1x8x256xf32>
    tpu.vector_store %arg11[%c0_28, %c0_29, %c0_30], %49 {strides = array<i32>} : memref<1x8x256xf32, #tpu.memory_space<vmem>>, vector<1x8x256xf32>,
    return
  }
  func.func @transform_0(%arg0: i32, %arg1: i32) -> i32 {
    %c0_i32 = arith.constant 0 : i32
    %c0_i32_0 = arith.constant 0 : i32
    return %c0_i32 : i32
  }
  func.func @transform_1(%arg0: i32, %arg1: i32) -> (i32, i32, i32) {
    %c0_i32 = arith.constant 0 : i32
    %c0_i32_0 = arith.constant 0 : i32
    return %arg0, %c0_i32, %arg1 : i32, i32, i32
  }
  func.func @transform_2(%arg0: i32, %arg1: i32) -> (i32, i32, i32) {
    %c0_i32 = arith.constant 0 : i32
    %c0_i32_0 = arith.constant 0 : i32
    %c0_i32_1 = arith.constant 0 : i32
    return %arg0, %c0_i32, %c0_i32_0 : i32, i32, i32
  }
  func.func @transform_3(%arg0: i32, %arg1: i32) -> (i32, i32, i32) {
    %c0_i32 = arith.constant 0 : i32
    %c0_i32_0 = arith.constant 0 : i32
    %c0_i32_1 = arith.constant 0 : i32
    return %arg0, %c0_i32, %c0_i32_0 : i32, i32, i32
  }
  func.func @transform_4(%arg0: i32, %arg1: i32) -> (i32, i32, i32) {
    %c0_i32 = arith.constant 0 : i32
    %c0_i32_0 = arith.constant 0 : i32
    return %arg0, %c0_i32, %arg1 : i32, i32, i32
  }
  func.func @transform_5(%arg0: i32, %arg1: i32) -> (i32, i32, i32) {
    %c0_i32 = arith.constant 0 : i32
    %c0_i32_0 = arith.constant 0 : i32
    return %arg0, %c0_i32, %arg1 : i32, i32, i32
  }
  func.func @transform_6(%arg0: i32, %arg1: i32) -> (i32, i32, i32) {
    %c0_i32 = arith.constant 0 : i32
    %c0_i32_0 = arith.constant 0 : i32
    return %arg0, %c0_i32, %arg1 : i32, i32, i32
  }
  func.func @transform_7(%arg0: i32, %arg1: i32) -> (i32, i32, i32) {
    %c0_i32 = arith.constant 0 : i32
    %c0_i32_0 = arith.constant 0 : i32
    return %arg0, %c0_i32, %arg1 : i32, i32, i32
  }
  func.func @transform_8(%arg0: i32, %arg1: i32) -> (i32, i32, i32) {
    %c0_i32 = arith.constant 0 : i32
    %c0_i32_0 = arith.constant 0 : i32
    return %arg0, %arg1, %c0_i32 : i32, i32, i32
  }
  func.func @transform_9(%arg0: i32, %arg1: i32) -> (i32, i32, i32) {
    %c0_i32 = arith.constant 0 : i32
    %c0_i32_0 = arith.constant 0 : i32
    return %arg0, %c0_i32, %arg1 : i32, i32, i32
  }
}

</mosaic_0001>

<llo_original>
// kernel: tpu_custom_call.1
$region0: #{tpu_custom_call.1}
  #allocation0 [shape = 'u32[]', space=smem, size = 0x4, offset = 0x4, fixed_abs, tag = 'smem constant byte address 0x4 - core index']
  #allocation1 [shape = 'u32[144,128]{1,0:T(1,128)}', space=vmem, size = 0x12000, scoped, tag = 'internal scratch']
  %s0 = inlined_call_operand.hbm [shape: f32[2], index: 0, kind: input, shape index: {}]
  %s1 = inlined_call_operand.hbm [shape: bf16[2,8,256], index: 1, kind: input, shape index: {}]
  %s2 = inlined_call_operand.hbm [shape: bf16[2,8,256], index: 2, kind: input, shape index: {}]
  %s3 = inlined_call_operand.hbm [shape: bf16[2,16,256], index: 3, kind: input, shape index: {}]
  %s4 = inlined_call_operand.hbm [shape: f32[2,8,256], index: 4, kind: input, shape index: {}]
  %s5 = inlined_call_operand.hbm [shape: f32[2,8,256], index: 5, kind: input, shape index: {}]
  %s6 = inlined_call_operand.vmem [shape: f32[2,1,256], index: 6, kind: input, shape index: {}]
  %s7 = inlined_call_operand.hbm [shape: f32[2,8,256], index: 7, kind: output, shape index: {0}]
  %s8 = inlined_call_operand.hbm [shape: bf16[2,256,256], index: 8, kind: output, shape index: {1}]
  %s9 = inlined_call_operand.hbm [shape: f32[2,8,256], index: 9, kind: output, shape index: {2}]
  %10 = xla_tuple %s7, %s8, %s9
  %s11 = sld [smem:[#allocation0]]
  $region101: #{tpu_custom_call.1} parent=0
    _
  %s13 = ssub.s32 1, %s11
  %s14 = scalar_select 0, %s13, %s11
  $region1: #{tpu_custom_call.1} parent=0
    #allocation2 [shape = 'u8[512]{0}', space=smem, size = 0x200, scoped, tag = 'input window, operand 0, single buffered']
    #allocation3 [shape = 's32[2]{0}', space=sflag, size = 0x8, scoped, tag = 'scoped memory for tpu_custom_call.1']
    #allocation4 [shape = 's32[2]{0}', space=sflag, size = 0x8, scoped, tag = 'scoped memory for tpu_custom_call.1']
    #allocation5 [shape = 's32[2]{0}', space=sflag, size = 0x8, scoped, tag = 'scoped memory for tpu_custom_call.1']
    #allocation6 [shape = 'u8[8192]{0}', space=vmem, size = 0x2000, scoped, tag = 'input window, operand 1']
    #allocation7 [shape = 'u8[8192]{0}', space=vmem, size = 0x2000, scoped, tag = 'input window, operand 2']
    #allocation8 [shape = 's32[2]{0}', space=sflag, size = 0x8, scoped, tag = 'scoped memory for tpu_custom_call.1']
    #allocation9 [shape = 'u8[16384]{0}', space=vmem, size = 0x4000, scoped, tag = 'input window, operand 3']
    #allocation10 [shape = 'u8[16384]{0}', space=vmem, size = 0x4000, scoped, tag = 'input window, operand 4']
    #allocation11 [shape = 's32[2]{0}', space=sflag, size = 0x8, scoped, tag = 'scoped memory for tpu_custom_call.1']
    #allocation12 [shape = 'u8[16384]{0}', space=vmem, size = 0x4000, scoped, tag = 'input window, operand 5']
    #allocation13 [shape = 'u8[16384]{0}', space=vmem, size = 0x4000, scoped, tag = 'output window, operand 0']
    #allocation14 [shape = 'u8[262144]{0}', space=vmem, size = 0x40000, scoped, tag = 'output window, operand 1']
    #allocation15 [shape = 's32[2]{0}', space=sflag, size = 0x8, scoped, tag = 'scoped memory for tpu_custom_call.1']
    #allocation16 [shape = 'u8[16384]{0}', space=vmem, size = 0x4000, scoped, tag = 'output window, operand 2']
    %15 = vsyncpa [#allocation5], 0
    %16 = vsyncpa [#allocation3], 0
    %s17 = scalar_lea.sflag [#allocation3], 1
    %18 = vsyncpa %s17, 0
    %19 = vsyncpa [#allocation8], 0
    %s20 = scalar_lea.sflag [#allocation8], 1
    %21 = vsyncpa %s20, 0
    %22 = vsyncpa [#allocation11], 0
    %s23 = scalar_lea.sflag [#allocation11], 1
    %24 = vsyncpa %s23, 0
    %25 = vsyncpa [#allocation4], 0
    %s26 = scalar_lea.sflag [#allocation4], 1
    %27 = vsyncpa %s26, 0
    %28 = vsyncpa [#allocation15], 0
    %s29 = scalar_lea.sflag [#allocation15], 1
    %30 = vsyncpa %s29, 0
    loop: start=0, step=1, limit=4
    $region2: #{tpu_custom_call.1} parent=1 // loop_pre_header
      _
    $region3: #{tpu_custom_call.1} parent=1 // loop_header
      %s32 = sphi 0, %s36
      %p33 = scmp.ge.s32.totalorder %s32, 4
      %s39 = sphi 0, %s51
      %s40 = sphi 0, %s47
      %s41 = sphi 0, %s39
      %s42 = sphi 0, %s40
      %s43 = sphi 0, %s41
      %s44 = sphi 0, %s42
      %s52 = sphi 0, %s52
      %s54 = sphi 0, %s52
      %s55 = sphi 0, %s54
      %s69 = sphi 0, %s55
      %s77 = sphi 0, %s79
      %s80 = sphi 0, %s77
      %s81 = sphi 0, %s80
      %s97 = sphi 0, %s81
      %s103 = sphi 0, %s105
      %s106 = sphi 0, %s103
      %s107 = sphi 0, %s106
      %s123 = sphi 0, %s107
      %s129 = sphi 0, %s131
      %s132 = sphi 0, %s129
      %s133 = sphi 0, %s132
      %s149 = sphi 0, %s133
      %s157 = sphi 0, %s159
      %s160 = sphi 0, %s157
      %s161 = sphi 0, %s160
      %s177 = sphi 0, %s161
      %s185 = sphi 0, %s187
      %s188 = sphi 0, %s185
      %s189 = sphi 0, %s188
      %s205 = sphi 0, %s189
      %s213 = sphi 0, %s215
      %s216 = sphi 0, %s213
      %s217 = sphi 0, %s216
      %s233 = sphi 0, %s217
      %s241 = sphi 0, %s243
      %s244 = sphi 0, %s241
      %s245 = sphi 0, %s244
      %s261 = sphi 0, %s245
      %s269 = sphi 0, %s271
      %s272 = sphi 0, %s269
      %s273 = sphi 0, %s272
      %s289 = sphi 0, %s273
      %s297 = sphi 0, %s299
      %s300 = sphi 0, %s297
      %s301 = sphi 0, %s300
      %s317 = sphi 0, %s301
    $region4: #{tpu_custom_call.1} parent=1 // loop_header_branch
      %35 = sbr.rel (%p33) target = $region8
    $region5: #{tpu_custom_call.1} parent=1 // loop_body
      %s37 = ssub.s32 %s32, 1
      %s38 = ssub.s32 %s32, 2
      %s45 = sadd.s32 1, %s40
      %p46 = scmp.ge.s32.totalorder %s45, 1
      %s47 = scalar_select %p46, 0, %s45
      %s48 = sadd.s32 1, %s39
      %s49 = scalar_select %p46, %s48, %s39
      %p50 = scmp.ge.s32.totalorder %s49, 2
      %s51 = scalar_select %p50, 0, %s49
      %s53 = sadd.s32 %s52, 1
      %p56 = scmp.eq.s32.totalorder %s32, 1
      %p57 = scmp.ne.s32.totalorder %s52, %s54
      %p58 = scmp.eq.s32.totalorder %s32, 0
      %p59 = por %p57, %p58
      %p60 = scmp.ne.s32.totalorder %s52, %s54
      %p61 = scmp.eq.s32.totalorder %s37, 1
      %p62 = por %p60, %p61
      %p63 = scmp.ne.s32.totalorder %s54, %s55
      %p64 = scmp.eq.s32.totalorder %s37, 0
      %p65 = por %p63, %p64
      %p66 = scmp.ne.s32.totalorder %s54, %s55
      %p67 = scmp.eq.s32.totalorder %s38, 1
      %p68 = por %p66, %p67
      %p70 = scmp.ne.s32.totalorder %s55, %s69
      %p71 = scmp.eq.s32.totalorder %s38, 0
      %p72 = por %p70, %p71
      %s73 = ssub.s32 %s39, %s51
      %s74 = ssub.s32 %s40, %s47
      %s75 = sor.u32 %s73, %s74
      %p76 = scmp.eq.s32.totalorder %s75, 0
      %s78 = sadd.s32 %s77, 1
      %s79 = scalar_select %p76, %s77, %s78
      %p82 = pneg %p76
      %p83 = scmp.eq.s32.totalorder %s32, 1
      %p84 = por %p82, %p83
      %p85 = scmp.ne.s32.totalorder %s77, %s80
      %p86 = scmp.eq.s32.totalorder %s32, 0
      %p87 = por %p85, %p86
      %p88 = scmp.ne.s32.totalorder %s77, %s80
      %p89 = scmp.eq.s32.totalorder %s37, 1
      %p90 = por %p88, %p89
      %p91 = scmp.ne.s32.totalorder %s80, %s81
      %p92 = scmp.eq.s32.totalorder %s37, 0
      %p93 = por %p91, %p92
      %p94 = scmp.ne.s32.totalorder %s80, %s81
      %p95 = scmp.eq.s32.totalorder %s38, 1
      %p96 = por %p94, %p95
      %p98 = scmp.ne.s32.totalorder %s81, %s97
      %p99 = scmp.eq.s32.totalorder %s38, 0
      %p100 = por %p98, %p99
      %s101 = ssub.s32 %s39, %s51
      %p102 = scmp.eq.s32.totalorder %s101, 0
      %s104 = sadd.s32 %s103, 1
      %s105 = scalar_select %p102, %s103, %s104
      %p108 = pneg %p102
      %p109 = scmp.eq.s32.totalorder %s32, 1
      %p110 = por %p108, %p109
      %p111 = scmp.ne.s32.totalorder %s103, %s106
      %p112 = scmp.eq.s32.totalorder %s32, 0
      %p113 = por %p111, %p112
      %p114 = scmp.ne.s32.totalorder %s103, %s106
      %p115 = scmp.eq.s32.totalorder %s37, 1
      %p116 = por %p114, %p115
      %p117 = scmp.ne.s32.totalorder %s106, %s107
      %p118 = scmp.eq.s32.totalorder %s37, 0
      %p119 = por %p117, %p118
      %p120 = scmp.ne.s32.totalorder %s106, %s107
      %p121 = scmp.eq.s32.totalorder %s38, 1
      %p122 = por %p120, %p121
      %p124 = scmp.ne.s32.totalorder %s107, %s123
      %p125 = scmp.eq.s32.totalorder %s38, 0
      %p126 = por %p124, %p125
      %s127 = ssub.s32 %s39, %s51
      %p128 = scmp.eq.s32.totalorder %s127, 0
      %s130 = sadd.s32 %s129, 1
      %s131 = scalar_select %p128, %s129, %s130
      %p134 = pneg %p128
      %p135 = scmp.eq.s32.totalorder %s32, 1
      %p136 = por %p134, %p135
      %p137 = scmp.ne.s32.totalorder %s129, %s132
      %p138 = scmp.eq.s32.totalorder %s32, 0
      %p139 = por %p137, %p138
      %p140 = scmp.ne.s32.totalorder %s129, %s132
      %p141 = scmp.eq.s32.totalorder %s37, 1
      %p142 = por %p140, %p141
      %p143 = scmp.ne.s32.totalorder %s132, %s133
      %p144 = scmp.eq.s32.totalorder %s37, 0
      %p145 = por %p143, %p144
      %p146 = scmp.ne.s32.totalorder %s132, %s133
      %p147 = scmp.eq.s32.totalorder %s38, 1
      %p148 = por %p146, %p147
      %p150 = scmp.ne.s32.totalorder %s133, %s149
      %p151 = scmp.eq.s32.totalorder %s38, 0
      %p152 = por %p150, %p151
      %s153 = ssub.s32 %s39, %s51
      %s154 = ssub.s32 %s40, %s47
      %s155 = sor.u32 %s153, %s154
      %p156 = scmp.eq.s32.totalorder %s155, 0
      %s158 = sadd.s32 %s157, 1
      %s159 = scalar_select %p156, %s157, %s158
      %p162 = pneg %p156
      %p163 = scmp.eq.s32.totalorder %s32, 1
      %p164 = por %p162, %p163
      %p165 = scmp.ne.s32.totalorder %s157, %s160
      %p166 = scmp.eq.s32.totalorder %s32, 0
      %p167 = por %p165, %p166
      %p168 = scmp.ne.s32.totalorder %s157, %s160
      %p169 = scmp.eq.s32.totalorder %s37, 1
      %p170 = por %p168, %p169
      %p171 = scmp.ne.s32.totalorder %s160, %s161
      %p172 = scmp.eq.s32.totalorder %s37, 0
      %p173 = por %p171, %p172
      %p174 = scmp.ne.s32.totalorder %s160, %s161
      %p175 = scmp.eq.s32.totalorder %s38, 1
      %p176 = por %p174, %p175
      %p178 = scmp.ne.s32.totalorder %s161, %s177
      %p179 = scmp.eq.s32.totalorder %s38, 0
      %p180 = por %p178, %p179
      %s181 = ssub.s32 %s39, %s51
      %s182 = ssub.s32 %s40, %s47
      %s183 = sor.u32 %s181, %s182
      %p184 = scmp.eq.s32.totalorder %s183, 0
      %s186 = sadd.s32 %s185, 1
      %s187 = scalar_select %p184, %s185, %s186
      %p190 = pneg %p184
      %p191 = scmp.eq.s32.totalorder %s32, 1
      %p192 = por %p190, %p191
      %p193 = scmp.ne.s32.totalorder %s185, %s188
      %p194 = scmp.eq.s32.totalorder %s32, 0
      %p195 = por %p193, %p194
      %p196 = scmp.ne.s32.totalorder %s185, %s188
      %p197 = scmp.eq.s32.totalorder %s37, 1
      %p198 = por %p196, %p197
      %p199 = scmp.ne.s32.totalorder %s188, %s189
      %p200 = scmp.eq.s32.totalorder %s37, 0
      %p201 = por %p199, %p200
      %p202 = scmp.ne.s32.totalorder %s188, %s189
      %p203 = scmp.eq.s32.totalorder %s38, 1
      %p204 = por %p202, %p203
      %p206 = scmp.ne.s32.totalorder %s189, %s205
      %p207 = scmp.eq.s32.totalorder %s38, 0
      %p208 = por %p206, %p207
      %s209 = ssub.s32 %s39, %s51
      %s210 = ssub.s32 %s40, %s47
      %s211 = sor.u32 %s209, %s210
      %p212 = scmp.eq.s32.totalorder %s211, 0
      %s214 = sadd.s32 %s213, 1
      %s215 = scalar_select %p212, %s213, %s214
      %p218 = pneg %p212
      %p219 = scmp.eq.s32.totalorder %s32, 1
      %p220 = por %p218, %p219
      %p221 = scmp.ne.s32.totalorder %s213, %s216
      %p222 = scmp.eq.s32.totalorder %s32, 0
      %p223 = por %p221, %p222
      %p224 = scmp.ne.s32.totalorder %s213, %s216
      %p225 = scmp.eq.s32.totalorder %s37, 1
      %p226 = por %p224, %p225
      %p227 = scmp.ne.s32.totalorder %s216, %s217
      %p228 = scmp.eq.s32.totalorder %s37, 0
      %p229 = por %p227, %p228
      %p230 = scmp.ne.s32.totalorder %s216, %s217
      %p231 = scmp.eq.s32.totalorder %s38, 1
      %p232 = por %p230, %p231
      %p234 = scmp.ne.s32.totalorder %s217, %s233
      %p235 = scmp.eq.s32.totalorder %s38, 0
      %p236 = por %p234, %p235
      %s237 = ssub.s32 %s39, %s51
      %s238 = ssub.s32 %s40, %s47
      %s239 = sor.u32 %s237, %s238
      %p240 = scmp.eq.s32.totalorder %s239, 0
      %s242 = sadd.s32 %s241, 1
      %s243 = scalar_select %p240, %s241, %s242
      %p246 = pneg %p240
      %p247 = scmp.eq.s32.totalorder %s32, 1
      %p248 = por %p246, %p247
      %p249 = scmp.ne.s32.totalorder %s241, %s244
      %p250 = scmp.eq.s32.totalorder %s32, 0
      %p251 = por %p249, %p250
      %p252 = scmp.ne.s32.totalorder %s241, %s244
      %p253 = scmp.eq.s32.totalorder %s37, 1
      %p254 = por %p252, %p253
      %p255 = scmp.ne.s32.totalorder %s244, %s245
      %p256 = scmp.eq.s32.totalorder %s37, 0
      %p257 = por %p255, %p256
      %p258 = scmp.ne.s32.totalorder %s244, %s245
      %p259 = scmp.eq.s32.totalorder %s38, 1
      %p260 = por %p258, %p259
      %p262 = scmp.ne.s32.totalorder %s245, %s261
      %p263 = scmp.eq.s32.totalorder %s38, 0
      %p264 = por %p262, %p263
      %s265 = ssub.s32 %s39, %s51
      %s266 = ssub.s32 %s40, %s47
      %s267 = sor.u32 %s265, %s266
      %p268 = scmp.eq.s32.totalorder %s267, 0
      %s270 = sadd.s32 %s269, 1
      %s271 = scalar_select %p268, %s269, %s270
      %p274 = pneg %p268
      %p275 = scmp.eq.s32.totalorder %s32, 1
      %p276 = por %p274, %p275
      %p277 = scmp.ne.s32.totalorder %s269, %s272
      %p278 = scmp.eq.s32.totalorder %s32, 0
      %p279 = por %p277, %p278
      %p280 = scmp.ne.s32.totalorder %s269, %s272
      %p281 = scmp.eq.s32.totalorder %s37, 1
      %p282 = por %p280, %p281
      %p283 = scmp.ne.s32.totalorder %s272, %s273
      %p284 = scmp.eq.s32.totalorder %s37, 0
      %p285 = por %p283, %p284
      %p286 = scmp.ne.s32.totalorder %s272, %s273
      %p287 = scmp.eq.s32.totalorder %s38, 1
      %p288 = por %p286, %p287
      %p290 = scmp.ne.s32.totalorder %s273, %s289
      %p291 = scmp.eq.s32.totalorder %s38, 0
      %p292 = por %p290, %p291
      %s293 = ssub.s32 %s39, %s51
      %s294 = ssub.s32 %s40, %s47
      %s295 = sor.u32 %s293, %s294
      %p296 = scmp.eq.s32.totalorder %s295, 0
      %s298 = sadd.s32 %s297, 1
      %s299 = scalar_select %p296, %s297, %s298
      %p302 = pneg %p296
      %p303 = scmp.eq.s32.totalorder %s32, 1
      %p304 = por %p302, %p303
      %p305 = scmp.ne.s32.totalorder %s297, %s300
      %p306 = scmp.eq.s32.totalorder %s32, 0
      %p307 = por %p305, %p306
      %p308 = scmp.ne.s32.totalorder %s297, %s300
      %p309 = scmp.eq.s32.totalorder %s37, 1
      %p310 = por %p308, %p309
      %p311 = scmp.ne.s32.totalorder %s300, %s301
      %p312 = scmp.eq.s32.totalorder %s37, 0
      %p313 = por %p311, %p312
      %p314 = scmp.ne.s32.totalorder %s300, %s301
      %p315 = scmp.eq.s32.totalorder %s38, 1
      %p316 = por %p314, %p315
      %p318 = scmp.ne.s32.totalorder %s301, %s317
      %p319 = scmp.eq.s32.totalorder %s38, 0
      %p320 = por %p318, %p319
      %p321 = scmp.le.s32.totalorder 1, %s32
      %p322 = scmp.lt.s32.totalorder %s32, 3
      %p323 = pnand %p321, %p322
      %p324 = pneg %p323
      // Predicated region
      $region9: #{tpu_custom_call.1} parent=5 // pred_check
        _
      $region10: #{tpu_custom_call.1} parent=5 // pred_check_branch
        %326 = sbr.rel (%p323) target = $region12
      $region11: #{tpu_custom_call.1} parent=5 // pred_region
        %s327 = ssub.s32 %s32, 1
        // Predicated region
        $region13: #{tpu_custom_call.1} parent=11 // pred_check
          %p328 = pneg %p65
        $region14: #{tpu_custom_call.1} parent=11 // pred_check_branch
          %330 = sbr.rel (%p328) target = $region16
        $region15: #{tpu_custom_call.1} parent=11 // pred_region
          %s332 = ssub.s32 16, 16
          %333 = vsyncadd [#allocation5], %s332
          %336 = dma.hbm_to_smem %s0, 16, [#allocation2], [#allocation5]
        $region16: #{tpu_custom_call.1} parent=11 // pred_fallthru
          _
      $region12: #{tpu_custom_call.1} parent=5 // pred_fallthru
        _
      %p337 = scmp.lt.s32.totalorder %s32, 2
      // Predicated region
      $region17: #{tpu_custom_call.1} parent=5 // pred_check
        %p338 = pneg %p337
      $region18: #{tpu_custom_call.1} parent=5 // pred_check_branch
        %340 = sbr.rel (%p338) target = $region20
      $region19: #{tpu_custom_call.1} parent=5 // pred_region
        // Predicated region
        $region21: #{tpu_custom_call.1} parent=19 // pred_check
          %p341 = pneg %p87
        $region22: #{tpu_custom_call.1} parent=19 // pred_check_branch
          %343 = sbr.rel (%p341) target = $region24
        $region23: #{tpu_custom_call.1} parent=19 // pred_region
          %s344 = sand.u32 %s77, 1
          %s345 = scalar_lea.sflag [#allocation3], %s344
          %s346 = sand.u32 %s77, 1
          %s347 = smul.addr %s346, 8
          %s348 = scalar_lea.vmem [#allocation6], %s347
          %s349 = smul.u32 2, %s40
          %s351 = ssub.s32 128, 128
          %352 = vsyncadd %s345, %s351
          %s353 = smul.addr %s39, 2
          %s354 = sadd.s32 %s349, %s353
          %s355 = smul.addr %s354, 64
          %s356 = scalar_lea.hbm %s1, %s355
          %s358 = sshll.u32 %s348, 4
          %s359 = int_to_ptr.vmem [resolvable:$true] %s358
          %361 = dma.hbm_to_vmem [thread:$0]  %s356, 128, %s359, %s345
        $region24: #{tpu_custom_call.1} parent=19 // pred_fallthru
          _
        // Predicated region
        $region25: #{tpu_custom_call.1} parent=19 // pred_check
          %p362 = pneg %p113
        $region26: #{tpu_custom_call.1} parent=19 // pred_check_branch
          %364 = sbr.rel (%p362) target = $region28
        $region27: #{tpu_custom_call.1} parent=19 // pred_region
          %s365 = sand.u32 %s32, 1
          %s366 = scalar_lea.sflag [#allocation8], %s365
          %s367 = sand.u32 %s103, 1
          %s368 = smul.addr %s367, 8
          %s369 = scalar_lea.vmem [#allocation7], %s368
          %s371 = ssub.s32 128, 128
          %372 = vsyncadd %s366, %s371
          %s373 = smul.addr %s39, 2
          %s374 = smul.addr %s373, 64
          %s375 = scalar_lea.hbm %s2, %s374
          %s377 = sshll.u32 %s369, 4
          %s378 = int_to_ptr.vmem [resolvable:$true] %s377
          %380 = dma.hbm_to_vmem [thread:$0]  %s375, 128, %s378, %s366
        $region28: #{tpu_custom_call.1} parent=19 // pred_fallthru
          _
        // Predicated region
        $region29: #{tpu_custom_call.1} parent=19 // pred_check
          %p381 = pneg %p139
        $region30: #{tpu_custom_call.1} parent=19 // pred_check_branch
          %383 = sbr.rel (%p381) target = $region32
        $region31: #{tpu_custom_call.1} parent=19 // pred_region
          %s384 = sand.u32 %s32, 1
          %s385 = scalar_lea.sflag [#allocation8], %s384
          %s386 = sand.u32 %s129, 1
          %s387 = smul.addr %s386, 16
          %s388 = scalar_lea.vmem [#allocation9], %s387
          %s390 = ssub.s32 256, 256
          %391 = vsyncadd %s385, %s390
          %s392 = smul.addr %s39, 4
          %s393 = smul.addr %s392, 64
          %s394 = scalar_lea.hbm %s3, %s393
          %s395 = sshll.u32 %s388, 4
          %s396 = int_to_ptr.vmem [resolvable:$true] %s395
          %401 = dma.hbm_to_vmem [thread:$0]  %s394, 256, %s396, %s385, 128, 128, 8
        $region32: #{tpu_custom_call.1} parent=19 // pred_fallthru
          _
        // Predicated region
        $region33: #{tpu_custom_call.1} parent=19 // pred_check
          %p402 = pneg %p167
        $region34: #{tpu_custom_call.1} parent=19 // pred_check_branch
          %404 = sbr.rel (%p402) target = $region36
        $region35: #{tpu_custom_call.1} parent=19 // pred_region
          %s405 = sand.u32 %s32, 1
          %s406 = scalar_lea.sflag [#allocation11], %s405
          %s407 = sand.u32 %s157, 1
          %s408 = smul.addr %s407, 16
          %s409 = scalar_lea.vmem [#allocation10], %s408
          %s410 = smul.u32 2, %s40
          %s412 = ssub.s32 256, 256
          %413 = vsyncadd %s406, %s412
          %s414 = smul.addr %s39, 2
          %s415 = sadd.s32 %s410, %s414
          %s416 = smul.addr %s415, 128
          %s417 = scalar_lea.hbm %s4, %s416
          %s419 = sshll.u32 %s409, 4
          %s420 = int_to_ptr.vmem [resolvable:$true] %s419
          %422 = dma.hbm_to_vmem [thread:$0]  %s417, 256, %s420, %s406
        $region36: #{tpu_custom_call.1} parent=19 // pred_fallthru
          _
        // Predicated region
        $region37: #{tpu_custom_call.1} parent=19 // pred_check
          %p423 = pneg %p195
        $region38: #{tpu_custom_call.1} parent=19 // pred_check_branch
          %425 = sbr.rel (%p423) target = $region40
        $region39: #{tpu_custom_call.1} parent=19 // pred_region
          %s426 = sand.u32 %s32, 1
          %s427 = scalar_lea.sflag [#allocation11], %s426
          %s428 = sand.u32 %s185, 1
          %s429 = smul.addr %s428, 16
          %s430 = scalar_lea.vmem [#allocation12], %s429
          %s431 = smul.u32 2, %s40
          %s433 = ssub.s32 256, 256
          %434 = vsyncadd %s427, %s433
          %s435 = smul.addr %s39, 2
          %s436 = sadd.s32 %s431, %s435
          %s437 = smul.addr %s436, 128
          %s438 = scalar_lea.hbm %s5, %s437
          %s440 = sshll.u32 %s430, 4
          %s441 = int_to_ptr.vmem [resolvable:$true] %s440
          %443 = dma.hbm_to_vmem [thread:$0]  %s438, 256, %s441, %s427
        $region40: #{tpu_custom_call.1} parent=19 // pred_fallthru
          _
        // Predicated region
        $region41: #{tpu_custom_call.1} parent=19 // pred_check
          %p444 = pneg %p223
        $region42: #{tpu_custom_call.1} parent=19 // pred_check_branch
          %446 = sbr.rel (%p444) target = $region44
        $region43: #{tpu_custom_call.1} parent=19 // pred_region
          %s447 = smul.u32 2, %s40
          %p448 = scmp.lt.s32.totalorder %s39, 1
          %s449 = scalar_select %p448, %s39, 1
          %p450 = scmp.lt.s32.totalorder %s447, 1
          %s451 = scalar_select %p450, %s447, 1
          %s452 = smul.addr %s449, 2
          %s453 = sadd.s32 %s451, %s452
          %s454 = scalar_lea.vmem %s6, %s453
          %s455 = smul.u32 2, %s40
        $region44: #{tpu_custom_call.1} parent=19 // pred_fallthru
          _
      $region20: #{tpu_custom_call.1} parent=5 // pred_fallthru
        _
      %p456 = scmp.le.s32.totalorder 1, %s32
      %p457 = scmp.lt.s32.totalorder %s32, 3
      %p458 = pnand %p456, %p457
      %p459 = pneg %p458
      // Predicated region
      $region45: #{tpu_custom_call.1} parent=5 // pred_check
        _
      $region46: #{tpu_custom_call.1} parent=5 // pred_check_branch
        %461 = sbr.rel (%p458) target = $region48
      $region47: #{tpu_custom_call.1} parent=5 // pred_region
        %s462 = ssub.s32 %s32, 1
        // Predicated region
        $region49: #{tpu_custom_call.1} parent=47 // pred_check
          %p463 = pneg %p65
        $region50: #{tpu_custom_call.1} parent=47 // pred_check_branch
          %465 = sbr.rel (%p463) target = $region52
        $region51: #{tpu_custom_call.1} parent=47 // pred_region
          %466 = dma.done [#allocation5], 16
        $region52: #{tpu_custom_call.1} parent=47 // pred_fallthru
          _
        %s467 = sand.u32 %s80, 1
        %s468 = scalar_lea.sflag [#allocation3], %s467
        %s469 = sand.u32 %s80, 1
        %s470 = smul.addr %s469, 8
        %s471 = scalar_lea.vmem [#allocation6], %s470
        // Predicated region
        $region53: #{tpu_custom_call.1} parent=47 // pred_check
          %p472 = pneg %p93
        $region54: #{tpu_custom_call.1} parent=47 // pred_check_branch
          %474 = sbr.rel (%p472) target = $region56
        $region55: #{tpu_custom_call.1} parent=47 // pred_region
          %475 = dma.done %s468, 128
        $region56: #{tpu_custom_call.1} parent=47 // pred_fallthru
          _
        %s476 = sand.u32 %s37, 1
        %s477 = scalar_lea.sflag [#allocation8], %s476
        %s478 = sand.u32 %s106, 1
        %s479 = smul.addr %s478, 8
        %s480 = scalar_lea.vmem [#allocation7], %s479
        // Predicated region
        $region57: #{tpu_custom_call.1} parent=47 // pred_check
          %p481 = pneg %p119
        $region58: #{tpu_custom_call.1} parent=47 // pred_check_branch
          %483 = sbr.rel (%p481) target = $region60
        $region59: #{tpu_custom_call.1} parent=47 // pred_region
          %484 = dma.done %s477, 128
        $region60: #{tpu_custom_call.1} parent=47 // pred_fallthru
          _
        %s485 = sand.u32 %s37, 1
        %s486 = scalar_lea.sflag [#allocation8], %s485
        %s487 = sand.u32 %s132, 1
        %s488 = smul.addr %s487, 16
        %s489 = scalar_lea.vmem [#allocation9], %s488
        // Predicated region
        $region61: #{tpu_custom_call.1} parent=47 // pred_check
          %p490 = pneg %p145
        $region62: #{tpu_custom_call.1} parent=47 // pred_check_branch
          %492 = sbr.rel (%p490) target = $region64
        $region63: #{tpu_custom_call.1} parent=47 // pred_region
          %493 = dma.done %s486, 256
        $region64: #{tpu_custom_call.1} parent=47 // pred_fallthru
          _
        %s494 = sand.u32 %s37, 1
        %s495 = scalar_lea.sflag [#allocation11], %s494
        %s496 = sand.u32 %s160, 1
        %s497 = smul.addr %s496, 16
        %s498 = scalar_lea.vmem [#allocation10], %s497
        // Predicated region
        $region65: #{tpu_custom_call.1} parent=47 // pred_check
          %p499 = pneg %p173
        $region66: #{tpu_custom_call.1} parent=47 // pred_check_branch
          %501 = sbr.rel (%p499) target = $region68
        $region67: #{tpu_custom_call.1} parent=47 // pred_region
          %502 = dma.done %s495, 256
        $region68: #{tpu_custom_call.1} parent=47 // pred_fallthru
          _
        %s503 = sand.u32 %s37, 1
        %s504 = scalar_lea.sflag [#allocation11], %s503
        %s505 = sand.u32 %s188, 1
        %s506 = smul.addr %s505, 16
        %s507 = scalar_lea.vmem [#allocation12], %s506
        // Predicated region
        $region69: #{tpu_custom_call.1} parent=47 // pred_check
          %p508 = pneg %p201
        $region70: #{tpu_custom_call.1} parent=47 // pred_check_branch
          %510 = sbr.rel (%p508) target = $region72
        $region71: #{tpu_custom_call.1} parent=47 // pred_region
          %511 = dma.done %s504, 256
        $region72: #{tpu_custom_call.1} parent=47 // pred_fallthru
          _
        %512 = sfence
        %p513 = pneg %p65
        %p514 = pneg %p62
        %s515 = sand.u32 %s80, 1
        %s516 = scalar_lea.sflag [#allocation3], %s515
        %s517 = sand.u32 %s80, 1
        %s518 = smul.addr %s517, 8
        %s519 = scalar_lea.vmem [#allocation6], %s518
        %p520 = pneg %p93
        %p521 = pneg %p90
        %s522 = sand.u32 %s37, 1
        %s523 = scalar_lea.sflag [#allocation8], %s522
        %s524 = sand.u32 %s106, 1
        %s525 = smul.addr %s524, 8
        %s526 = scalar_lea.vmem [#allocation7], %s525
        %p527 = pneg %p119
        %p528 = pneg %p116
        %s529 = sand.u32 %s37, 1
        %s530 = scalar_lea.sflag [#allocation8], %s529
        %s531 = sand.u32 %s132, 1
        %s532 = smul.addr %s531, 16
        %s533 = scalar_lea.vmem [#allocation9], %s532
        %p534 = pneg %p145
        %p535 = pneg %p142
        %s536 = sand.u32 %s37, 1
        %s537 = scalar_lea.sflag [#allocation11], %s536
        %s538 = sand.u32 %s160, 1
        %s539 = smul.addr %s538, 16
        %s540 = scalar_lea.vmem [#allocation10], %s539
        %p541 = pneg %p173
        %p542 = pneg %p170
        %s543 = sand.u32 %s37, 1
        %s544 = scalar_lea.sflag [#allocation11], %s543
        %s545 = sand.u32 %s188, 1
        %s546 = smul.addr %s545, 16
        %s547 = scalar_lea.vmem [#allocation12], %s546
        %p548 = pneg %p201
        %p549 = pneg %p198
        %s550 = smul.u32 2, %s42
        %p551 = scmp.lt.s32.totalorder %s41, 1
        %s552 = scalar_select %p551, %s41, 1
        %p553 = scmp.lt.s32.totalorder %s550, 1
        %s554 = scalar_select %p553, %s550, 1
        %s555 = smul.addr %s552, 2
        %s556 = sadd.s32 %s554, %s555
        %s557 = scalar_lea.vmem %s6, %s556
        %p558 = pneg %p229
        %p559 = pneg %p226
        %p560 = pneg %p257
        %p561 = pneg %p254
        %s562 = sand.u32 %s244, 1
        %s563 = scalar_lea.sflag [#allocation4], %s562
        %s564 = sand.u32 %s244, 1
        %s565 = smul.addr %s564, 16
        %s566 = scalar_lea.vmem [#allocation13], %s565
        %p567 = pneg %p285
        %p568 = pneg %p282
        %s569 = sand.u32 %s37, 1
        %s570 = scalar_lea.sflag [#allocation15], %s569
        %s571 = sand.u32 %s272, 1
        %s572 = smul.addr %s571, 256
        %s573 = scalar_lea.vmem [#allocation14], %s572
        %p574 = pneg %p313
        %p575 = pneg %p310
        %s576 = sand.u32 %s37, 1
        %s577 = scalar_lea.sflag [#allocation15], %s576
        %s578 = sand.u32 %s300, 1
        %s579 = smul.addr %s578, 16
        %s580 = scalar_lea.vmem [#allocation16], %s579
        %s581 = smul.u32 2, %s42
        %s582 = smul.u32 2, %s42
        %s583 = smul.u32 2, %s42
        %s584 = smul.u32 2, %s42
        %p585 = scmp.lt.s32.totalorder %s41, 1
        %s586 = scalar_select %p585, %s41, 1
        %p587 = scmp.lt.s32.totalorder %s584, 1
        %s588 = scalar_select %p587, %s584, 1
        %s589 = smul.addr %s586, 2
        %s590 = sadd.s32 %s588, %s589
        %s591 = scalar_lea.vmem %s6, %s590
        %s592 = smul.u32 2, %s42
        %s593 = smul.u32 2, %s42
        %s594 = smul.u32 32, %s42
        %s595 = smul.u32 2, %s42
        %v597 = vld [vmem:[%s471] sm:$0xff]
        %v598 = vld [vmem:[%s480] sm:$0xff]
        %v599 = vld [vmem:[%s489] sm:$0xff]
        %v600 = vld [vmem:[%s489 + $0x8] sm:$0xff]
        %v602 = vunpack.c.l.b16 %v597
        %v603 = vunpack.c.h.b16 %v597
        %v604 = vpack.c.b16 %v602, %v602
        %v605 = vpack.c.b16 %v603, %v603
        %608 = vxpose.xlu0.c.b16.start [1/8] %v604, 128
        %609 = vxpose.xlu0.c.b16.cont [2/8] 0, 128
        %610 = vxpose.xlu0.c.b16.cont [3/8] 0, 128
        %611 = vxpose.xlu0.c.b16.cont [4/8] 0, 128
        %612 = vxpose.xlu0.c.b16.cont [5/8] 0, 128
        %613 = vxpose.xlu0.c.b16.cont [6/8] 0, 128
        %614 = vxpose.xlu0.c.b16.cont [7/8] 0, 128
        %615 = vxpose.xlu0.c.b16.end [8/8] 0, 128
        %v616 = vpop.trf.xlu0
        %v617 = vpop.trf.xlu0
        %v618 = vpop.trf.xlu0
        %v619 = vpop.trf.xlu0
        %v620 = vpop.trf.xlu0
        %v621 = vpop.trf.xlu0
        %v622 = vpop.trf.xlu0
        %v623 = vpop.trf.xlu0
        %624 = vxpose.xlu0.c.b16.start [1/8] %v605, 128
        %625 = vxpose.xlu0.c.b16.cont [2/8] 0, 128
        %626 = vxpose.xlu0.c.b16.cont [3/8] 0, 128
        %627 = vxpose.xlu0.c.b16.cont [4/8] 0, 128
        %628 = vxpose.xlu0.c.b16.cont [5/8] 0, 128
        %629 = vxpose.xlu0.c.b16.cont [6/8] 0, 128
        %630 = vxpose.xlu0.c.b16.cont [7/8] 0, 128
        %631 = vxpose.xlu0.c.b16.end [8/8] 0, 128
        %v632 = vpop.trf.xlu0
        %v633 = vpop.trf.xlu0
        %v634 = vpop.trf.xlu0
        %v635 = vpop.trf.xlu0
        %v636 = vpop.trf.xlu0
        %v637 = vpop.trf.xlu0
        %v638 = vpop.trf.xlu0
        %v639 = vpop.trf.xlu0
        %v641 = vunpack.c.l.b16 %v598
        %v642 = vunpack.c.h.b16 %v598
        %v643 = vpack.c.b16 %v641, %v641
        %v644 = vpack.c.b16 %v642, %v642
        %vm645 = vcmask 64512
        %v647 = vsel %vm645, %v616, 0
        %v650 = vsel %vm645, %v617, 0
        %v653 = vsel %vm645, %v618, 0
        %v656 = vsel %vm645, %v619, 0
        %v659 = vsel %vm645, %v620, 0
        %v662 = vsel %vm645, %v621, 0
        %v665 = vsel %vm645, %v622, 0
        %v668 = vsel %vm645, %v623, 0
        %v671 = vsel %vm645, %v632, 0
        %v674 = vsel %vm645, %v633, 0
        %v677 = vsel %vm645, %v634, 0
        %v680 = vsel %vm645, %v635, 0
        %v683 = vsel %vm645, %v636, 0
        %v686 = vsel %vm645, %v637, 0
        %v689 = vsel %vm645, %v638, 0
        %v692 = vsel %vm645, %v639, 0
        %vm694 = vcmask 1043456
        %v696 = vsel %vm694, %v643, 0
        %v699 = vsel %vm694, %v644, 0
        %701 = vmatprep.subr.bf16.mxu0 0
        %702 = vmatpush1.bf16.msra.mxu0 0
        %703 = vmatprep.subr.bf16.mxu0 0
        %704 = vmatpush1.bf16.msra.mxu0 0
        %705 = vmatprep.subr.bf16.mxu0 0
        %706 = vmatpush1.bf16.msra.mxu0 0
        %707 = vmatprep.subr.bf16.mxu0 0
        %708 = vmatpush1.bf16.msra.mxu0 0
        %709 = vmatprep.subr.bf16.mxu0 0
        %710 = vmatpush1.bf16.msra.mxu0 0
        %711 = vmatprep.subr.bf16.mxu0 0
        %712 = vmatpush1.bf16.msra.mxu0 0
        %713 = vmatprep.subr.bf16.mxu0 0
        %714 = vmatpush1.bf16.msra.mxu0 0
        %715 = vmatprep.subr.bf16.mxu0 %v699
        %716 = vmatpush1.bf16.msra.mxu0 %v696
        %717 = vmatprep.subr.bf16.mxu0 0
        %718 = vmatpush2.bf16.msra.mxu0 0
        %719 = vmatprep.subr.bf16.mxu0 0
        %720 = vmatpush2.bf16.msra.mxu0 0
        %721 = vmatprep.subr.bf16.mxu0 0
        %722 = vmatpush2.bf16.msra.mxu0 0
        %723 = vmatprep.subr.bf16.mxu0 0
        %724 = vmatpush2.bf16.msra.mxu0 0
        %725 = vmatprep.subr.bf16.mxu0 0
        %726 = vmatpush2.bf16.msra.mxu0 0
        %727 = vmatprep.subr.bf16.mxu0 0
        %728 = vmatpush2.bf16.msra.mxu0 0
        %729 = vmatprep.subr.bf16.mxu0 0
        %730 = vmatpush2.bf16.msra.mxu0 0
        %731 = vmatprep.subr.bf16.mxu0 0
        %732 = vmatpush2.bf16.msra.mxu0 0
        %733 = vmatprep.mubr.bf16.mxu0 0
        %734 = vmatmul.mubr.bf16.gmra.mxu0 %v647
        %v735 = vpop.f32.mrf.mxu0
        %v736 = vadd.f32 0.0, %v735
        %v737 = vpop.f32.mrf.mxu0
        %v738 = vadd.f32 0.0, %v737
        %v739 = vpop.f32.mrf.mxu0
        %v740 = vadd.f32 0.0, %v739
        %v741 = vpop.f32.mrf.mxu0
        %v742 = vadd.f32 0.0, %v741
        %743 = vmatprep.mubr.bf16.mxu0 0
        %744 = vmatmul.mubr.bf16.gmra.mxu0 %v650
        %v745 = vpop.f32.mrf.mxu0
        %v746 = vadd.f32 0.0, %v745
        %v747 = vpop.f32.mrf.mxu0
        %v748 = vadd.f32 0.0, %v747
        %v749 = vpop.f32.mrf.mxu0
        %v750 = vadd.f32 0.0, %v749
        %v751 = vpop.f32.mrf.mxu0
        %v752 = vadd.f32 0.0, %v751
        %753 = vmatprep.mubr.bf16.mxu0 0
        %754 = vmatmul.mubr.bf16.gmra.mxu0 %v653
        %v755 = vpop.f32.mrf.mxu0
        %v756 = vadd.f32 0.0, %v755
        %v757 = vpop.f32.mrf.mxu0
        %v758 = vadd.f32 0.0, %v757
        %v759 = vpop.f32.mrf.mxu0
        %v760 = vadd.f32 0.0, %v759
        %v761 = vpop.f32.mrf.mxu0
        %v762 = vadd.f32 0.0, %v761
        %763 = vmatprep.mubr.bf16.mxu0 0
        %764 = vmatmul.mubr.bf16.gmra.mxu0 %v656
        %v765 = vpop.f32.mrf.mxu0
        %v766 = vadd.f32 0.0, %v765
        %v767 = vpop.f32.mrf.mxu0
        %v768 = vadd.f32 0.0, %v767
        %v769 = vpop.f32.mrf.mxu0
        %v770 = vadd.f32 0.0, %v769
        %v771 = vpop.f32.mrf.mxu0
        %v772 = vadd.f32 0.0, %v771
        %773 = vmatprep.mubr.bf16.mxu0 0
        %774 = vmatmul.mubr.bf16.gmra.mxu0 %v659
        %v775 = vpop.f32.mrf.mxu0
        %v776 = vadd.f32 0.0, %v775
        %v777 = vpop.f32.mrf.mxu0
        %v778 = vadd.f32 0.0, %v777
        %v779 = vpop.f32.mrf.mxu0
        %v780 = vadd.f32 0.0, %v779
        %v781 = vpop.f32.mrf.mxu0
        %v782 = vadd.f32 0.0, %v781
        %783 = vmatprep.mubr.bf16.mxu0 0
        %784 = vmatmul.mubr.bf16.gmra.mxu0 %v662
        %v785 = vpop.f32.mrf.mxu0
        %v786 = vadd.f32 0.0, %v785
        %v787 = vpop.f32.mrf.mxu0
        %v788 = vadd.f32 0.0, %v787
        %v789 = vpop.f32.mrf.mxu0
        %v790 = vadd.f32 0.0, %v789
        %v791 = vpop.f32.mrf.mxu0
        %v792 = vadd.f32 0.0, %v791
        %793 = vmatprep.mubr.bf16.mxu0 0
        %794 = vmatmul.mubr.bf16.gmra.mxu0 %v665
        %v795 = vpop.f32.mrf.mxu0
        %v796 = vadd.f32 0.0, %v795
        %v797 = vpop.f32.mrf.mxu0
        %v798 = vadd.f32 0.0, %v797
        %v799 = vpop.f32.mrf.mxu0
        %v800 = vadd.f32 0.0, %v799
        %v801 = vpop.f32.mrf.mxu0
        %v802 = vadd.f32 0.0, %v801
        %803 = vmatprep.mubr.bf16.mxu0 0
        %804 = vmatmul.mubr.bf16.gmra.mxu0 %v668
        %v805 = vpop.f32.mrf.mxu0
        %v806 = vadd.f32 0.0, %v805
        %v807 = vpop.f32.mrf.mxu0
        %v808 = vadd.f32 0.0, %v807
        %v809 = vpop.f32.mrf.mxu0
        %v810 = vadd.f32 0.0, %v809
        %v811 = vpop.f32.mrf.mxu0
        %v812 = vadd.f32 0.0, %v811
        %813 = vmatprep.mubr.bf16.mxu0 0
        %814 = vmatmul.mubr.bf16.gmra.mxu0 %v671
        %v815 = vpop.f32.mrf.mxu0
        %v816 = vadd.f32 0.0, %v815
        %v817 = vpop.f32.mrf.mxu0
        %v818 = vadd.f32 0.0, %v817
        %v819 = vpop.f32.mrf.mxu0
        %v820 = vadd.f32 0.0, %v819
        %v821 = vpop.f32.mrf.mxu0
        %v822 = vadd.f32 0.0, %v821
        %823 = vmatprep.mubr.bf16.mxu0 0
        %824 = vmatmul.mubr.bf16.gmra.mxu0 %v674
        %v825 = vpop.f32.mrf.mxu0
        %v826 = vadd.f32 0.0, %v825
        %v827 = vpop.f32.mrf.mxu0
        %v828 = vadd.f32 0.0, %v827
        %v829 = vpop.f32.mrf.mxu0
        %v830 = vadd.f32 0.0, %v829
        %v831 = vpop.f32.mrf.mxu0
        %v832 = vadd.f32 0.0, %v831
        %833 = vmatprep.mubr.bf16.mxu0 0
        %834 = vmatmul.mubr.bf16.gmra.mxu0 %v677
        %v835 = vpop.f32.mrf.mxu0
        %v836 = vadd.f32 0.0, %v835
        %v837 = vpop.f32.mrf.mxu0
        %v838 = vadd.f32 0.0, %v837
        %v839 = vpop.f32.mrf.mxu0
        %v840 = vadd.f32 0.0, %v839
        %v841 = vpop.f32.mrf.mxu0
        %v842 = vadd.f32 0.0, %v841
        %843 = vmatprep.mubr.bf16.mxu0 0
        %844 = vmatmul.mubr.bf16.gmra.mxu0 %v680
        %v845 = vpop.f32.mrf.mxu0
        %v846 = vadd.f32 0.0, %v845
        %v847 = vpop.f32.mrf.mxu0
        %v848 = vadd.f32 0.0, %v847
        %v849 = vpop.f32.mrf.mxu0
        %v850 = vadd.f32 0.0, %v849
        %v851 = vpop.f32.mrf.mxu0
        %v852 = vadd.f32 0.0, %v851
        %853 = vmatprep.mubr.bf16.mxu0 0
        %854 = vmatmul.mubr.bf16.gmra.mxu0 %v683
        %v855 = vpop.f32.mrf.mxu0
        %v856 = vadd.f32 0.0, %v855
        %v857 = vpop.f32.mrf.mxu0
        %v858 = vadd.f32 0.0, %v857
        %v859 = vpop.f32.mrf.mxu0
        %v860 = vadd.f32 0.0, %v859
        %v861 = vpop.f32.mrf.mxu0
        %v862 = vadd.f32 0.0, %v861
        %863 = vmatprep.mubr.bf16.mxu0 0
        %864 = vmatmul.mubr.bf16.gmra.mxu0 %v686
        %v865 = vpop.f32.mrf.mxu0
        %v866 = vadd.f32 0.0, %v865
        %v867 = vpop.f32.mrf.mxu0
        %v868 = vadd.f32 0.0, %v867
        %v869 = vpop.f32.mrf.mxu0
        %v870 = vadd.f32 0.0, %v869
        %v871 = vpop.f32.mrf.mxu0
        %v872 = vadd.f32 0.0, %v871
        %873 = vmatprep.mubr.bf16.mxu0 0
        %874 = vmatmul.mubr.bf16.gmra.mxu0 %v689
        %v875 = vpop.f32.mrf.mxu0
        %v876 = vadd.f32 0.0, %v875
        %v877 = vpop.f32.mrf.mxu0
        %v878 = vadd.f32 0.0, %v877
        %v879 = vpop.f32.mrf.mxu0
        %v880 = vadd.f32 0.0, %v879
        %v881 = vpop.f32.mrf.mxu0
        %v882 = vadd.f32 0.0, %v881
        %883 = vmatprep.mubr.bf16.mxu0 0
        %884 = vmatmul.mubr.bf16.gmra.mxu0 %v692
        %v885 = vpop.f32.mrf.mxu0
        %v886 = vadd.f32 0.0, %v885
        %v887 = vpop.f32.mrf.mxu0
        %v888 = vadd.f32 0.0, %v887
        %v889 = vpop.f32.mrf.mxu0
        %v890 = vadd.f32 0.0, %v889
        %v891 = vpop.f32.mrf.mxu0
        %v892 = vadd.f32 0.0, %v891
        %893 = vdwg.mxu0
        %v894 = vmax.f32 %v736, %v738
        %895 = vmax.xlane.f32.xlu0 %v894
        %v896 = vpop.xlane.xlu0 %895
        %v897 = vmax.f32 %v740, %v742
        %898 = vmax.xlane.f32.xlu0 %v897
        %v899 = vpop.xlane.xlu0 %898
        %v900 = vmax.f32 %v746, %v748
        %901 = vmax.xlane.f32.xlu0 %v900
        %v902 = vpop.xlane.xlu0 %901
        %v903 = vmax.f32 %v750, %v752
        %904 = vmax.xlane.f32.xlu0 %v903
        %v905 = vpop.xlane.xlu0 %904
        %v906 = vmax.f32 %v756, %v758
        %907 = vmax.xlane.f32.xlu0 %v906
        %v908 = vpop.xlane.xlu0 %907
        %v909 = vmax.f32 %v760, %v762
        %910 = vmax.xlane.f32.xlu0 %v909
        %v911 = vpop.xlane.xlu0 %910
        %v912 = vmax.f32 %v766, %v768
        %913 = vmax.xlane.f32.xlu0 %v912
        %v914 = vpop.xlane.xlu0 %913
        %v915 = vmax.f32 %v770, %v772
        %916 = vmax.xlane.f32.xlu0 %v915
        %v917 = vpop.xlane.xlu0 %916
        %v918 = vmax.f32 %v776, %v778
        %919 = vmax.xlane.f32.xlu0 %v918
        %v920 = vpop.xlane.xlu0 %919
        %v921 = vmax.f32 %v780, %v782
        %922 = vmax.xlane.f32.xlu0 %v921
        %v923 = vpop.xlane.xlu0 %922
        %v924 = vmax.f32 %v786, %v788
        %925 = vmax.xlane.f32.xlu0 %v924
        %v926 = vpop.xlane.xlu0 %925
        %v927 = vmax.f32 %v790, %v792
        %928 = vmax.xlane.f32.xlu0 %v927
        %v929 = vpop.xlane.xlu0 %928
        %v930 = vmax.f32 %v796, %v798
        %931 = vmax.xlane.f32.xlu0 %v930
        %v932 = vpop.xlane.xlu0 %931
        %v933 = vmax.f32 %v800, %v802
        %934 = vmax.xlane.f32.xlu0 %v933
        %v935 = vpop.xlane.xlu0 %934
        %v936 = vmax.f32 %v806, %v808
        %937 = vmax.xlane.f32.xlu0 %v936
        %v938 = vpop.xlane.xlu0 %937
        %v939 = vmax.f32 %v810, %v812
        %940 = vmax.xlane.f32.xlu0 %v939
        %v941 = vpop.xlane.xlu0 %940
        %v942 = vmax.f32 %v816, %v818
        %943 = vmax.xlane.f32.xlu0 %v942
        %v944 = vpop.xlane.xlu0 %943
        %v945 = vmax.f32 %v820, %v822
        %946 = vmax.xlane.f32.xlu0 %v945
        %v947 = vpop.xlane.xlu0 %946
        %v948 = vmax.f32 %v826, %v828
        %949 = vmax.xlane.f32.xlu0 %v948
        %v950 = vpop.xlane.xlu0 %949
        %v951 = vmax.f32 %v830, %v832
        %952 = vmax.xlane.f32.xlu0 %v951
        %v953 = vpop.xlane.xlu0 %952
        %v954 = vmax.f32 %v836, %v838
        %955 = vmax.xlane.f32.xlu0 %v954
        %v956 = vpop.xlane.xlu0 %955
        %v957 = vmax.f32 %v840, %v842
        %958 = vmax.xlane.f32.xlu0 %v957
        %v959 = vpop.xlane.xlu0 %958
        %v960 = vmax.f32 %v846, %v848
        %961 = vmax.xlane.f32.xlu0 %v960
        %v962 = vpop.xlane.xlu0 %961
        %v963 = vmax.f32 %v850, %v852
        %964 = vmax.xlane.f32.xlu0 %v963
        %v965 = vpop.xlane.xlu0 %964
        %v966 = vmax.f32 %v856, %v858
        %967 = vmax.xlane.f32.xlu0 %v966
        %v968 = vpop.xlane.xlu0 %967
        %v969 = vmax.f32 %v860, %v862
        %970 = vmax.xlane.f32.xlu0 %v969
        %v971 = vpop.xlane.xlu0 %970
        %v972 = vmax.f32 %v866, %v868
        %973 = vmax.xlane.f32.xlu0 %v972
        %v974 = vpop.xlane.xlu0 %973
        %v975 = vmax.f32 %v870, %v872
        %976 = vmax.xlane.f32.xlu0 %v975
        %v977 = vpop.xlane.xlu0 %976
        %v978 = vmax.f32 %v876, %v878
        %979 = vmax.xlane.f32.xlu0 %v978
        %v980 = vpop.xlane.xlu0 %979
        %v981 = vmax.f32 %v880, %v882
        %982 = vmax.xlane.f32.xlu0 %v981
        %v983 = vpop.xlane.xlu0 %982
        %v984 = vmax.f32 %v886, %v888
        %985 = vmax.xlane.f32.xlu0 %v984
        %v986 = vpop.xlane.xlu0 %985
        %v987 = vmax.f32 %v890, %v892
        %988 = vmax.xlane.f32.xlu0 %v987
        %v989 = vpop.xlane.xlu0 %988
        %v990 = vsub.f32 %v736, %v896
        %v991 = vsub.f32 %v738, %v896
        %v992 = vsub.f32 %v740, %v899
        %v993 = vsub.f32 %v742, %v899
        %v994 = vsub.f32 %v746, %v902
        %v995 = vsub.f32 %v748, %v902
        %v996 = vsub.f32 %v750, %v905
        %v997 = vsub.f32 %v752, %v905
        %v998 = vsub.f32 %v756, %v908
        %v999 = vsub.f32 %v758, %v908
        %v1000 = vsub.f32 %v760, %v911
        %v1001 = vsub.f32 %v762, %v911
        %v1002 = vsub.f32 %v766, %v914
        %v1003 = vsub.f32 %v768, %v914
        %v1004 = vsub.f32 %v770, %v917
        %v1005 = vsub.f32 %v772, %v917
        %v1006 = vsub.f32 %v776, %v920
        %v1007 = vsub.f32 %v778, %v920
        %v1008 = vsub.f32 %v780, %v923
        %v1009 = vsub.f32 %v782, %v923
        %v1010 = vsub.f32 %v786, %v926
        %v1011 = vsub.f32 %v788, %v926
        %v1012 = vsub.f32 %v790, %v929
        %v1013 = vsub.f32 %v792, %v929
        %v1014 = vsub.f32 %v796, %v932
        %v1015 = vsub.f32 %v798, %v932
        %v1016 = vsub.f32 %v800, %v935
        %v1017 = vsub.f32 %v802, %v935
        %v1018 = vsub.f32 %v806, %v938
        %v1019 = vsub.f32 %v808, %v938
        %v1020 = vsub.f32 %v810, %v941
        %v1021 = vsub.f32 %v812, %v941
        %v1022 = vsub.f32 %v816, %v944
        %v1023 = vsub.f32 %v818, %v944
        %v1024 = vsub.f32 %v820, %v947
        %v1025 = vsub.f32 %v822, %v947
        %v1026 = vsub.f32 %v826, %v950
        %v1027 = vsub.f32 %v828, %v950
        %v1028 = vsub.f32 %v830, %v953
        %v1029 = vsub.f32 %v832, %v953
        %v1030 = vsub.f32 %v836, %v956
        %v1031 = vsub.f32 %v838, %v956
        %v1032 = vsub.f32 %v840, %v959
        %v1033 = vsub.f32 %v842, %v959
        %v1034 = vsub.f32 %v846, %v962
        %v1035 = vsub.f32 %v848, %v962
        %v1036 = vsub.f32 %v850, %v965
        %v1037 = vsub.f32 %v852, %v965
        %v1038 = vsub.f32 %v856, %v968
        %v1039 = vsub.f32 %v858, %v968
        %v1040 = vsub.f32 %v860, %v971
        %v1041 = vsub.f32 %v862, %v971
        %v1042 = vsub.f32 %v866, %v974
        %v1043 = vsub.f32 %v868, %v974
        %v1044 = vsub.f32 %v870, %v977
        %v1045 = vsub.f32 %v872, %v977
        %v1046 = vsub.f32 %v876, %v980
        %v1047 = vsub.f32 %v878, %v980
        %v1048 = vsub.f32 %v880, %v983
        %v1049 = vsub.f32 %v882, %v983
        %v1050 = vsub.f32 %v886, %v986
        %v1051 = vsub.f32 %v888, %v986
        %v1052 = vsub.f32 %v890, %v989
        %v1053 = vsub.f32 %v892, %v989
        %v1054 = vmul.f32 %v990, 1.442695
        %v1055 = vpow.pop %v1054
        %v1056 = vmul.f32 %v991, 1.442695
        %v1057 = vpow.pop %v1056
        %v1058 = vmul.f32 %v992, 1.442695
        %v1059 = vpow.pop %v1058
        %v1060 = vmul.f32 %v993, 1.442695
        %v1061 = vpow.pop %v1060
        %v1062 = vmul.f32 %v994, 1.442695
        %v1063 = vpow.pop %v1062
        %v1064 = vmul.f32 %v995, 1.442695
        %v1065 = vpow.pop %v1064
        %v1066 = vmul.f32 %v996, 1.442695
        %v1067 = vpow.pop %v1066
        %v1068 = vmul.f32 %v997, 1.442695
        %v1069 = vpow.pop %v1068
        %v1070 = vmul.f32 %v998, 1.442695
        %v1071 = vpow.pop %v1070
        %v1072 = vmul.f32 %v999, 1.442695
        %v1073 = vpow.pop %v1072
        %v1074 = vmul.f32 %v1000, 1.442695
        %v1075 = vpow.pop %v1074
        %v1076 = vmul.f32 %v1001, 1.442695
        %v1077 = vpow.pop %v1076
        %v1078 = vmul.f32 %v1002, 1.442695
        %v1079 = vpow.pop %v1078
        %v1080 = vmul.f32 %v1003, 1.442695
        %v1081 = vpow.pop %v1080
        %v1082 = vmul.f32 %v1004, 1.442695
        %v1083 = vpow.pop %v1082
        %v1084 = vmul.f32 %v1005, 1.442695
        %v1085 = vpow.pop %v1084
        %v1086 = vmul.f32 %v1006, 1.442695
        %v1087 = vpow.pop %v1086
        %v1088 = vmul.f32 %v1007, 1.442695
        %v1089 = vpow.pop %v1088
        %v1090 = vmul.f32 %v1008, 1.442695
        %v1091 = vpow.pop %v1090
        %v1092 = vmul.f32 %v1009, 1.442695
        %v1093 = vpow.pop %v1092
        %v1094 = vmul.f32 %v1010, 1.442695
        %v1095 = vpow.pop %v1094
        %v1096 = vmul.f32 %v1011, 1.442695
        %v1097 = vpow.pop %v1096
        %v1098 = vmul.f32 %v1012, 1.442695
        %v1099 = vpow.pop %v1098
        %v1100 = vmul.f32 %v1013, 1.442695
        %v1101 = vpow.pop %v1100
        %v1102 = vmul.f32 %v1014, 1.442695
        %v1103 = vpow.pop %v1102
        %v1104 = vmul.f32 %v1015, 1.442695
        %v1105 = vpow.pop %v1104
        %v1106 = vmul.f32 %v1016, 1.442695
        %v1107 = vpow.pop %v1106
        %v1108 = vmul.f32 %v1017, 1.442695
        %v1109 = vpow.pop %v1108
        %v1110 = vmul.f32 %v1018, 1.442695
        %v1111 = vpow.pop %v1110
        %v1112 = vmul.f32 %v1019, 1.442695
        %v1113 = vpow.pop %v1112
        %v1114 = vmul.f32 %v1020, 1.442695
        %v1115 = vpow.pop %v1114
        %v1116 = vmul.f32 %v1021, 1.442695
        %v1117 = vpow.pop %v1116
        %v1118 = vmul.f32 %v1022, 1.442695
        %v1119 = vpow.pop %v1118
        %v1120 = vmul.f32 %v1023, 1.442695
        %v1121 = vpow.pop %v1120
        %v1122 = vmul.f32 %v1024, 1.442695
        %v1123 = vpow.pop %v1122
        %v1124 = vmul.f32 %v1025, 1.442695
        %v1125 = vpow.pop %v1124
        %v1126 = vmul.f32 %v1026, 1.442695
        %v1127 = vpow.pop %v1126
        %v1128 = vmul.f32 %v1027, 1.442695
        %v1129 = vpow.pop %v1128
        %v1130 = vmul.f32 %v1028, 1.442695
        %v1131 = vpow.pop %v1130
        %v1132 = vmul.f32 %v1029, 1.442695
        %v1133 = vpow.pop %v1132
        %v1134 = vmul.f32 %v1030, 1.442695
        %v1135 = vpow.pop %v1134
        %v1136 = vmul.f32 %v1031, 1.442695
        %v1137 = vpow.pop %v1136
        %v1138 = vmul.f32 %v1032, 1.442695
        %v1139 = vpow.pop %v1138
        %v1140 = vmul.f32 %v1033, 1.442695
        %v1141 = vpow.pop %v1140
        %v1142 = vmul.f32 %v1034, 1.442695
        %v1143 = vpow.pop %v1142
        %v1144 = vmul.f32 %v1035, 1.442695
        %v1145 = vpow.pop %v1144
        %v1146 = vmul.f32 %v1036, 1.442695
        %v1147 = vpow.pop %v1146
        %v1148 = vmul.f32 %v1037, 1.442695
        %v1149 = vpow.pop %v1148
        %v1150 = vmul.f32 %v1038, 1.442695
        %v1151 = vpow.pop %v1150
        %v1152 = vmul.f32 %v1039, 1.442695
        %v1153 = vpow.pop %v1152
        %v1154 = vmul.f32 %v1040, 1.442695
        %v1155 = vpow.pop %v1154
        %v1156 = vmul.f32 %v1041, 1.442695
        %v1157 = vpow.pop %v1156
        %v1158 = vmul.f32 %v1042, 1.442695
        %v1159 = vpow.pop %v1158
        %v1160 = vmul.f32 %v1043, 1.442695
        %v1161 = vpow.pop %v1160
        %v1162 = vmul.f32 %v1044, 1.442695
        %v1163 = vpow.pop %v1162
        %v1164 = vmul.f32 %v1045, 1.442695
        %v1165 = vpow.pop %v1164
        %v1166 = vmul.f32 %v1046, 1.442695
        %v1167 = vpow.pop %v1166
        %v1168 = vmul.f32 %v1047, 1.442695
        %v1169 = vpow.pop %v1168
        %v1170 = vmul.f32 %v1048, 1.442695
        %v1171 = vpow.pop %v1170
        %v1172 = vmul.f32 %v1049, 1.442695
        %v1173 = vpow.pop %v1172
        %v1174 = vmul.f32 %v1050, 1.442695
        %v1175 = vpow.pop %v1174
        %v1176 = vmul.f32 %v1051, 1.442695
        %v1177 = vpow.pop %v1176
        %v1178 = vmul.f32 %v1052, 1.442695
        %v1179 = vpow.pop %v1178
        %v1180 = vmul.f32 %v1053, 1.442695
        %v1181 = vpow.pop %v1180
        %v1182 = vadd.f32 %v1055, %v1057
        %1183 = vadd.xlane.f32.xlu0 %v1182
        %v1184 = vpop.xlane.xlu0 %1183
        %v1185 = vadd.f32 %v1059, %v1061
        %1186 = vadd.xlane.f32.xlu0 %v1185
        %v1187 = vpop.xlane.xlu0 %1186
        %v1188 = vadd.f32 %v1063, %v1065
        %1189 = vadd.xlane.f32.xlu0 %v1188
        %v1190 = vpop.xlane.xlu0 %1189
        %v1191 = vadd.f32 %v1067, %v1069
        %1192 = vadd.xlane.f32.xlu0 %v1191
        %v1193 = vpop.xlane.xlu0 %1192
        %v1194 = vadd.f32 %v1071, %v1073
        %1195 = vadd.xlane.f32.xlu0 %v1194
        %v1196 = vpop.xlane.xlu0 %1195
        %v1197 = vadd.f32 %v1075, %v1077
        %1198 = vadd.xlane.f32.xlu0 %v1197
        %v1199 = vpop.xlane.xlu0 %1198
        %v1200 = vadd.f32 %v1079, %v1081
        %1201 = vadd.xlane.f32.xlu0 %v1200
        %v1202 = vpop.xlane.xlu0 %1201
        %v1203 = vadd.f32 %v1083, %v1085
        %1204 = vadd.xlane.f32.xlu0 %v1203
        %v1205 = vpop.xlane.xlu0 %1204
        %v1206 = vadd.f32 %v1087, %v1089
        %1207 = vadd.xlane.f32.xlu0 %v1206
        %v1208 = vpop.xlane.xlu0 %1207
        %v1209 = vadd.f32 %v1091, %v1093
        %1210 = vadd.xlane.f32.xlu0 %v1209
        %v1211 = vpop.xlane.xlu0 %1210
        %v1212 = vadd.f32 %v1095, %v1097
        %1213 = vadd.xlane.f32.xlu0 %v1212
        %v1214 = vpop.xlane.xlu0 %1213
        %v1215 = vadd.f32 %v1099, %v1101
        %1216 = vadd.xlane.f32.xlu0 %v1215
        %v1217 = vpop.xlane.xlu0 %1216
        %v1218 = vadd.f32 %v1103, %v1105
        %1219 = vadd.xlane.f32.xlu0 %v1218
        %v1220 = vpop.xlane.xlu0 %1219
        %v1221 = vadd.f32 %v1107, %v1109
        %1222 = vadd.xlane.f32.xlu0 %v1221
        %v1223 = vpop.xlane.xlu0 %1222
        %v1224 = vadd.f32 %v1111, %v1113
        %1225 = vadd.xlane.f32.xlu0 %v1224
        %v1226 = vpop.xlane.xlu0 %1225
        %v1227 = vadd.f32 %v1115, %v1117
        %1228 = vadd.xlane.f32.xlu0 %v1227
        %v1229 = vpop.xlane.xlu0 %1228
        %v1230 = vadd.f32 %v1119, %v1121
        %1231 = vadd.xlane.f32.xlu0 %v1230
        %v1232 = vpop.xlane.xlu0 %1231
        %v1233 = vadd.f32 %v1123, %v1125
        %1234 = vadd.xlane.f32.xlu0 %v1233
        %v1235 = vpop.xlane.xlu0 %1234
        %v1236 = vadd.f32 %v1127, %v1129
        %1237 = vadd.xlane.f32.xlu0 %v1236
        %v1238 = vpop.xlane.xlu0 %1237
        %v1239 = vadd.f32 %v1131, %v1133
        %1240 = vadd.xlane.f32.xlu0 %v1239
        %v1241 = vpop.xlane.xlu0 %1240
        %v1242 = vadd.f32 %v1135, %v1137
        %1243 = vadd.xlane.f32.xlu0 %v1242
        %v1244 = vpop.xlane.xlu0 %1243
        %v1245 = vadd.f32 %v1139, %v1141
        %1246 = vadd.xlane.f32.xlu0 %v1245
        %v1247 = vpop.xlane.xlu0 %1246
        %v1248 = vadd.f32 %v1143, %v1145
        %1249 = vadd.xlane.f32.xlu0 %v1248
        %v1250 = vpop.xlane.xlu0 %1249
        %v1251 = vadd.f32 %v1147, %v1149
        %1252 = vadd.xlane.f32.xlu0 %v1251
        %v1253 = vpop.xlane.xlu0 %1252
        %v1254 = vadd.f32 %v1151, %v1153
        %1255 = vadd.xlane.f32.xlu0 %v1254
        %v1256 = vpop.xlane.xlu0 %1255
        %v1257 = vadd.f32 %v1155, %v1157
        %1258 = vadd.xlane.f32.xlu0 %v1257
        %v1259 = vpop.xlane.xlu0 %1258
        %v1260 = vadd.f32 %v1159, %v1161
        %1261 = vadd.xlane.f32.xlu0 %v1260
        %v1262 = vpop.xlane.xlu0 %1261
        %v1263 = vadd.f32 %v1163, %v1165
        %1264 = vadd.xlane.f32.xlu0 %v1263
        %v1265 = vpop.xlane.xlu0 %1264
        %v1266 = vadd.f32 %v1167, %v1169
        %1267 = vadd.xlane.f32.xlu0 %v1266
        %v1268 = vpop.xlane.xlu0 %1267
        %v1269 = vadd.f32 %v1171, %v1173
        %1270 = vadd.xlane.f32.xlu0 %v1269
        %v1271 = vpop.xlane.xlu0 %1270
        %v1272 = vadd.f32 %v1175, %v1177
        %1273 = vadd.xlane.f32.xlu0 %v1272
        %v1274 = vpop.xlane.xlu0 %1273
        %v1275 = vadd.f32 %v1179, %v1181
        %1276 = vadd.xlane.f32.xlu0 %v1275
        %v1277 = vpop.xlane.xlu0 %1276
        %v1278 = vrcp.pop %v1184
        %v1279 = vrcp.pop %v1187
        %v1280 = vrcp.pop %v1190
        %v1281 = vrcp.pop %v1193
        %v1282 = vrcp.pop %v1196
        %v1283 = vrcp.pop %v1199
        %v1284 = vrcp.pop %v1202
        %v1285 = vrcp.pop %v1205
        %v1286 = vrcp.pop %v1208
        %v1287 = vrcp.pop %v1211
        %v1288 = vrcp.pop %v1214
        %v1289 = vrcp.pop %v1217
        %v1290 = vrcp.pop %v1220
        %v1291 = vrcp.pop %v1223
        %v1292 = vrcp.pop %v1226
        %v1293 = vrcp.pop %v1229
        %v1294 = vrcp.pop %v1232
        %v1295 = vrcp.pop %v1235
        %v1296 = vrcp.pop %v1238
        %v1297 = vrcp.pop %v1241
        %v1298 = vrcp.pop %v1244
        %v1299 = vrcp.pop %v1247
        %v1300 = vrcp.pop %v1250
        %v1301 = vrcp.pop %v1253
        %v1302 = vrcp.pop %v1256
        %v1303 = vrcp.pop %v1259
        %v1304 = vrcp.pop %v1262
        %v1305 = vrcp.pop %v1265
        %v1306 = vrcp.pop %v1268
        %v1307 = vrcp.pop %v1271
        %v1308 = vrcp.pop %v1274
        %v1309 = vrcp.pop %v1277
        %v1310 = vmul.f32 %v1055, %v1278
        %v1311 = vmul.f32 %v1057, %v1278
        %v1312 = vmul.f32 %v1059, %v1279
        %v1313 = vmul.f32 %v1061, %v1279
        %v1314 = vmul.f32 %v1063, %v1280
        %v1315 = vmul.f32 %v1065, %v1280
        %v1316 = vmul.f32 %v1067, %v1281
        %v1317 = vmul.f32 %v1069, %v1281
        %v1318 = vmul.f32 %v1071, %v1282
        %v1319 = vmul.f32 %v1073, %v1282
        %v1320 = vmul.f32 %v1075, %v1283
        %v1321 = vmul.f32 %v1077, %v1283
        %v1322 = vmul.f32 %v1079, %v1284
        %v1323 = vmul.f32 %v1081, %v1284
        %v1324 = vmul.f32 %v1083, %v1285
        %v1325 = vmul.f32 %v1085, %v1285
        %v1326 = vmul.f32 %v1087, %v1286
        %v1327 = vmul.f32 %v1089, %v1286
        %v1328 = vmul.f32 %v1091, %v1287
        %v1329 = vmul.f32 %v1093, %v1287
        %v1330 = vmul.f32 %v1095, %v1288
        %v1331 = vmul.f32 %v1097, %v1288
        %v1332 = vmul.f32 %v1099, %v1289
        %v1333 = vmul.f32 %v1101, %v1289
        %v1334 = vmul.f32 %v1103, %v1290
        %v1335 = vmul.f32 %v1105, %v1290
        %v1336 = vmul.f32 %v1107, %v1291
        %v1337 = vmul.f32 %v1109, %v1291
        %v1338 = vmul.f32 %v1111, %v1292
        %v1339 = vmul.f32 %v1113, %v1292
        %v1340 = vmul.f32 %v1115, %v1293
        %v1341 = vmul.f32 %v1117, %v1293
        %v1342 = vmul.f32 %v1119, %v1294
        %v1343 = vmul.f32 %v1121, %v1294
        %v1344 = vmul.f32 %v1123, %v1295
        %v1345 = vmul.f32 %v1125, %v1295
        %v1346 = vmul.f32 %v1127, %v1296
        %v1347 = vmul.f32 %v1129, %v1296
        %v1348 = vmul.f32 %v1131, %v1297
        %v1349 = vmul.f32 %v1133, %v1297
        %v1350 = vmul.f32 %v1135, %v1298
        %v1351 = vmul.f32 %v1137, %v1298
        %v1352 = vmul.f32 %v1139, %v1299
        %v1353 = vmul.f32 %v1141, %v1299
        %v1354 = vmul.f32 %v1143, %v1300
        %v1355 = vmul.f32 %v1145, %v1300
        %v1356 = vmul.f32 %v1147, %v1301
        %v1357 = vmul.f32 %v1149, %v1301
        %v1358 = vmul.f32 %v1151, %v1302
        %v1359 = vmul.f32 %v1153, %v1302
        %v1360 = vmul.f32 %v1155, %v1303
        %v1361 = vmul.f32 %v1157, %v1303
        %v1362 = vmul.f32 %v1159, %v1304
        %v1363 = vmul.f32 %v1161, %v1304
        %v1364 = vmul.f32 %v1163, %v1305
        %v1365 = vmul.f32 %v1165, %v1305
        %v1366 = vmul.f32 %v1167, %v1306
        %v1367 = vmul.f32 %v1169, %v1306
        %v1368 = vmul.f32 %v1171, %v1307
        %v1369 = vmul.f32 %v1173, %v1307
        %v1370 = vmul.f32 %v1175, %v1308
        %v1371 = vmul.f32 %v1177, %v1308
        %v1372 = vmul.f32 %v1179, %v1309
        %v1373 = vmul.f32 %v1181, %v1309
        %v1374 = vpack.c.bf16 %v1312, %v1310
        %v1375 = vpack.c.bf16 %v1313, %v1311
        %v1376 = vpack.c.bf16 %v1316, %v1314
        %v1377 = vpack.c.bf16 %v1317, %v1315
        %v1378 = vpack.c.bf16 %v1320, %v1318
        %v1379 = vpack.c.bf16 %v1321, %v1319
        %v1380 = vpack.c.bf16 %v1324, %v1322
        %v1381 = vpack.c.bf16 %v1325, %v1323
        %v1382 = vpack.c.bf16 %v1328, %v1326
        %v1383 = vpack.c.bf16 %v1329, %v1327
        %v1384 = vpack.c.bf16 %v1332, %v1330
        %v1385 = vpack.c.bf16 %v1333, %v1331
        %v1386 = vpack.c.bf16 %v1336, %v1334
        %v1387 = vpack.c.bf16 %v1337, %v1335
        %v1388 = vpack.c.bf16 %v1340, %v1338
        %v1389 = vpack.c.bf16 %v1341, %v1339
        %v1390 = vpack.c.bf16 %v1344, %v1342
        %v1391 = vpack.c.bf16 %v1345, %v1343
        %v1392 = vpack.c.bf16 %v1348, %v1346
        %v1393 = vpack.c.bf16 %v1349, %v1347
        %v1394 = vpack.c.bf16 %v1352, %v1350
        %v1395 = vpack.c.bf16 %v1353, %v1351
        %v1396 = vpack.c.bf16 %v1356, %v1354
        %v1397 = vpack.c.bf16 %v1357, %v1355
        %v1398 = vpack.c.bf16 %v1360, %v1358
        %v1399 = vpack.c.bf16 %v1361, %v1359
        %v1400 = vpack.c.bf16 %v1364, %v1362
        %v1401 = vpack.c.bf16 %v1365, %v1363
        %v1402 = vpack.c.bf16 %v1368, %v1366
        %v1403 = vpack.c.bf16 %v1369, %v1367
        %v1404 = vpack.c.bf16 %v1372, %v1370
        %v1405 = vpack.c.bf16 %v1373, %v1371
        %v1438 = vunpack.c.l.b16 %v1374
        %v1439 = vunpack.c.l.b16 %v1375
        %v1440 = vunpack.c.h.b16 %v1374
        %v1441 = vunpack.c.h.b16 %v1375
        %v1442 = vunpack.c.l.b16 %v1376
        %v1443 = vunpack.c.l.b16 %v1377
        %v1444 = vunpack.c.h.b16 %v1376
        %v1445 = vunpack.c.h.b16 %v1377
        %v1446 = vunpack.c.l.b16 %v1378
        %v1447 = vunpack.c.l.b16 %v1379
        %v1448 = vunpack.c.h.b16 %v1378
        %v1449 = vunpack.c.h.b16 %v1379
        %v1450 = vunpack.c.l.b16 %v1380
        %v1451 = vunpack.c.l.b16 %v1381
        %v1452 = vunpack.c.h.b16 %v1380
        %v1453 = vunpack.c.h.b16 %v1381
        %v1454 = vunpack.c.l.b16 %v1382
        %v1455 = vunpack.c.l.b16 %v1383
        %v1456 = vunpack.c.h.b16 %v1382
        %v1457 = vunpack.c.h.b16 %v1383
        %v1458 = vunpack.c.l.b16 %v1384
        %v1459 = vunpack.c.l.b16 %v1385
        %v1460 = vunpack.c.h.b16 %v1384
        %v1461 = vunpack.c.h.b16 %v1385
        %v1462 = vunpack.c.l.b16 %v1386
        %v1463 = vunpack.c.l.b16 %v1387
        %v1464 = vunpack.c.h.b16 %v1386
        %v1465 = vunpack.c.h.b16 %v1387
        %v1466 = vunpack.c.l.b16 %v1388
        %v1467 = vunpack.c.l.b16 %v1389
        %v1468 = vunpack.c.h.b16 %v1388
        %v1469 = vunpack.c.h.b16 %v1389
        %v1470 = vunpack.c.l.b16 %v1390
        %v1471 = vunpack.c.l.b16 %v1391
        %v1472 = vunpack.c.h.b16 %v1390
        %v1473 = vunpack.c.h.b16 %v1391
        %v1474 = vunpack.c.l.b16 %v1392
        %v1475 = vunpack.c.l.b16 %v1393
        %v1476 = vunpack.c.h.b16 %v1392
        %v1477 = vunpack.c.h.b16 %v1393
        %v1478 = vunpack.c.l.b16 %v1394
        %v1479 = vunpack.c.l.b16 %v1395
        %v1480 = vunpack.c.h.b16 %v1394
        %v1481 = vunpack.c.h.b16 %v1395
        %v1482 = vunpack.c.l.b16 %v1396
        %v1483 = vunpack.c.l.b16 %v1397
        %v1484 = vunpack.c.h.b16 %v1396
        %v1485 = vunpack.c.h.b16 %v1397
        %v1486 = vunpack.c.l.b16 %v1398
        %v1487 = vunpack.c.l.b16 %v1399
        %v1488 = vunpack.c.h.b16 %v1398
        %v1489 = vunpack.c.h.b16 %v1399
        %v1490 = vunpack.c.l.b16 %v1400
        %v1491 = vunpack.c.l.b16 %v1401
        %v1492 = vunpack.c.h.b16 %v1400
        %v1493 = vunpack.c.h.b16 %v1401
        %v1494 = vunpack.c.l.b16 %v1402
        %v1495 = vunpack.c.l.b16 %v1403
        %v1496 = vunpack.c.h.b16 %v1402
        %v1497 = vunpack.c.h.b16 %v1403
        %v1498 = vunpack.c.l.b16 %v1404
        %v1499 = vunpack.c.l.b16 %v1405
        %v1500 = vunpack.c.h.b16 %v1404
        %v1501 = vunpack.c.h.b16 %v1405
        %v1502 = vpack.c.b16 %v1439, %v1438
        %v1503 = vpack.c.b16 %v1441, %v1440
        %v1504 = vpack.c.b16 %v1443, %v1442
        %v1505 = vpack.c.b16 %v1445, %v1444
        %v1506 = vpack.c.b16 %v1447, %v1446
        %v1507 = vpack.c.b16 %v1449, %v1448
        %v1508 = vpack.c.b16 %v1451, %v1450
        %v1509 = vpack.c.b16 %v1453, %v1452
        %v1510 = vpack.c.b16 %v1455, %v1454
        %v1511 = vpack.c.b16 %v1457, %v1456
        %v1512 = vpack.c.b16 %v1459, %v1458
        %v1513 = vpack.c.b16 %v1461, %v1460
        %v1514 = vpack.c.b16 %v1463, %v1462
        %v1515 = vpack.c.b16 %v1465, %v1464
        %v1516 = vpack.c.b16 %v1467, %v1466
        %v1517 = vpack.c.b16 %v1469, %v1468
        %v1518 = vpack.c.b16 %v1471, %v1470
        %v1519 = vpack.c.b16 %v1473, %v1472
        %v1520 = vpack.c.b16 %v1475, %v1474
        %v1521 = vpack.c.b16 %v1477, %v1476
        %v1522 = vpack.c.b16 %v1479, %v1478
        %v1523 = vpack.c.b16 %v1481, %v1480
        %v1524 = vpack.c.b16 %v1483, %v1482
        %v1525 = vpack.c.b16 %v1485, %v1484
        %v1526 = vpack.c.b16 %v1487, %v1486
        %v1527 = vpack.c.b16 %v1489, %v1488
        %v1528 = vpack.c.b16 %v1491, %v1490
        %v1529 = vpack.c.b16 %v1493, %v1492
        %v1530 = vpack.c.b16 %v1495, %v1494
        %v1531 = vpack.c.b16 %v1497, %v1496
        %v1532 = vpack.c.b16 %v1499, %v1498
        %v1533 = vpack.c.b16 %v1501, %v1500
        %1566 = vst [vmem:[%s573] sm:$0xff] %v1502
        %1567 = vst [vmem:[%s573 + $0x8] sm:$0xff] %v1503
        %1568 = vst [vmem:[%s573 + $0x10] sm:$0xff] %v1504
        %1569 = vst [vmem:[%s573 + $0x18] sm:$0xff] %v1505
        %1570 = vst [vmem:[%s573 + $0x20] sm:$0xff] %v1506
        %1571 = vst [vmem:[%s573 + $0x28] sm:$0xff] %v1507
        %1572 = vst [vmem:[%s573 + $0x30] sm:$0xff] %v1508
        %1573 = vst [vmem:[%s573 + $0x38] sm:$0xff] %v1509
        %1574 = vst [vmem:[%s573 + $0x40] sm:$0xff] %v1510
        %1575 = vst [vmem:[%s573 + $0x48] sm:$0xff] %v1511
        %1576 = vst [vmem:[%s573 + $0x50] sm:$0xff] %v1512
        %1577 = vst [vmem:[%s573 + $0x58] sm:$0xff] %v1513
        %1578 = vst [vmem:[%s573 + $0x60] sm:$0xff] %v1514
        %1579 = vst [vmem:[%s573 + $0x68] sm:$0xff] %v1515
        %1580 = vst [vmem:[%s573 + $0x70] sm:$0xff] %v1516
        %1581 = vst [vmem:[%s573 + $0x78] sm:$0xff] %v1517
        %1582 = vst [vmem:[%s573 + $0x80] sm:$0xff] %v1518
        %1583 = vst [vmem:[%s573 + $0x88] sm:$0xff] %v1519
        %1584 = vst [vmem:[%s573 + $0x90] sm:$0xff] %v1520
        %1585 = vst [vmem:[%s573 + $0x98] sm:$0xff] %v1521
        %1586 = vst [vmem:[%s573 + $0xa0] sm:$0xff] %v1522
        %1587 = vst [vmem:[%s573 + $0xa8] sm:$0xff] %v1523
        %1588 = vst [vmem:[%s573 + $0xb0] sm:$0xff] %v1524
        %1589 = vst [vmem:[%s573 + $0xb8] sm:$0xff] %v1525
        %1590 = vst [vmem:[%s573 + $0xc0] sm:$0xff] %v1526
        %1591 = vst [vmem:[%s573 + $0xc8] sm:$0xff] %v1527
        %1592 = vst [vmem:[%s573 + $0xd0] sm:$0xff] %v1528
        %1593 = vst [vmem:[%s573 + $0xd8] sm:$0xff] %v1529
        %1594 = vst [vmem:[%s573 + $0xe0] sm:$0xff] %v1530
        %1595 = vst [vmem:[%s573 + $0xe8] sm:$0xff] %v1531
        %1596 = vst [vmem:[%s573 + $0xf0] sm:$0xff] %v1532
        %1597 = vst [vmem:[%s573 + $0xf8] sm:$0xff] %v1533
        %v1600 = vunpack.c.l.b16 %v599
        %v1601 = vunpack.c.h.b16 %v599
        %v1602 = vunpack.c.l.b16 %v600
        %v1603 = vunpack.c.h.b16 %v600
        %v1604 = vpack.c.b16 %v1602, %v1600
        %v1605 = vpack.c.b16 %v1603, %v1601
        %1608 = vmatprep.subr.bf16.mxu0 %v1389
        %1609 = vmatpush1.bf16.xpose.msra.mxu0 %v1388
        %1610 = vmatprep.subr.bf16.mxu0 %v1387
        %1611 = vmatpush1.bf16.xpose.msra.mxu0 %v1386
        %1612 = vmatprep.subr.bf16.mxu0 %v1385
        %1613 = vmatpush1.bf16.xpose.msra.mxu0 %v1384
        %1614 = vmatprep.subr.bf16.mxu0 %v1383
        %1615 = vmatpush1.bf16.xpose.msra.mxu0 %v1382
        %1616 = vmatprep.subr.bf16.mxu0 %v1381
        %1617 = vmatpush1.bf16.xpose.msra.mxu0 %v1380
        %1618 = vmatprep.subr.bf16.mxu0 %v1379
        %1619 = vmatpush1.bf16.xpose.msra.mxu0 %v1378
        %1620 = vmatprep.subr.bf16.mxu0 %v1377
        %1621 = vmatpush1.bf16.xpose.msra.mxu0 %v1376
        %1622 = vmatprep.subr.bf16.mxu0 %v1375
        %1623 = vmatpush1.bf16.xpose.msra.mxu0 %v1374
        %1624 = vmatprep.subr.bf16.mxu0 %v1405
        %1625 = vmatpush2.bf16.xpose.msra.mxu0 %v1404
        %1626 = vmatprep.subr.bf16.mxu0 %v1403
        %1627 = vmatpush2.bf16.xpose.msra.mxu0 %v1402
        %1628 = vmatprep.subr.bf16.mxu0 %v1401
        %1629 = vmatpush2.bf16.xpose.msra.mxu0 %v1400
        %1630 = vmatprep.subr.bf16.mxu0 %v1399
        %1631 = vmatpush2.bf16.xpose.msra.mxu0 %v1398
        %1632 = vmatprep.subr.bf16.mxu0 %v1397
        %1633 = vmatpush2.bf16.xpose.msra.mxu0 %v1396
        %1634 = vmatprep.subr.bf16.mxu0 %v1395
        %1635 = vmatpush2.bf16.xpose.msra.mxu0 %v1394
        %1636 = vmatprep.subr.bf16.mxu0 %v1393
        %1637 = vmatpush2.bf16.xpose.msra.mxu0 %v1392
        %1638 = vmatprep.subr.bf16.mxu0 %v1391
        %1639 = vmatpush2.bf16.xpose.msra.mxu0 %v1390
        %1640 = vmatprep.mubr.bf16.mxu0 %v1605
        %1641 = vmatmul.mubr.bf16.gmra.mxu0 %v1604
        %v1642 = vpop.f32.mrf.mxu0
        %v1643 = vadd.f32 0.0, %v1642
        %v1644 = vpop.f32.mrf.mxu0
        %v1645 = vadd.f32 0.0, %v1644
        %v1646 = vpop.f32.mrf.mxu0
        %v1647 = vadd.f32 0.0, %v1646
        %v1648 = vpop.f32.mrf.mxu0
        %v1649 = vadd.f32 0.0, %v1648
        %1650 = vdwg.mxu0
        %s1651 = sld [smem:[#allocation2]]
        %s1652 = sld [smem:[#allocation2 + $0x1]]
        %v1653 = vstv %s1651
        %v1654 = vmul.f32 %v1653, %v1643
        %v1655 = vmul.f32 %v1653, %v1645
        %v1656 = vld [vmem:[%s498] sm:$0xff]
        %v1657 = vld [vmem:[%s498 + $0x8] sm:$0xff]
        %v1658 = vadd.f32 %v1654, %v1656
        %v1659 = vadd.f32 %v1655, %v1657
        %1660 = vst [vmem:[%s566] sm:$0xff] %v1658
        %1661 = vst [vmem:[%s566 + $0x8] sm:$0xff] %v1659
        %v1662 = vld [vmem:[%s591] sm:$0x3]
        %v1663 = vsub.f32 1.0, %v1662
        %v1664 = vstv %s1652
        %v1665 = vmul.f32 %v1664, %v1663
        %v1667 = vlaneseq
        %v1668 = vshrl.u32 %v1667, 7
        %v1669 = vsub.s32 0, %v1668
        %v1670 = vrot.slane %v1665, %v1669
        %v1671 = vlaneseq
        %v1672 = vshrl.u32 %v1671, 7
        %v1673 = vsub.s32 1, %v1672
        %v1674 = vrot.slane %v1665, %v1673
        %v1677 = vmul.f32 %v1670, %v1647
        %v1678 = vmul.f32 %v1674, %v1649
        %v1679 = vld [vmem:[%s507] sm:$0xff]
        %v1680 = vld [vmem:[%s507 + $0x8] sm:$0xff]
        %v1682 = vlaneseq
        %v1683 = vshrl.u32 %v1682, 7
        %v1684 = vsub.s32 0, %v1683
        %v1685 = vrot.slane %v1662, %v1684
        %v1686 = vlaneseq
        %v1687 = vshrl.u32 %v1686, 7
        %v1688 = vsub.s32 1, %v1687
        %v1689 = vrot.slane %v1662, %v1688
        %v1692 = vmul.f32 %v1685, %v1679
        %v1693 = vmul.f32 %v1689, %v1680
        %v1694 = vadd.f32 %v1677, %v1692
        %v1695 = vadd.f32 %v1678, %v1693
        %1696 = vst [vmem:[%s580] sm:$0xff] %v1694
        %1697 = vst [vmem:[%s580 + $0x8] sm:$0xff] %v1695
        %s1698 = sand.u32 %s244, 1
        %s1699 = scalar_lea.sflag [#allocation4], %s1698
        %s1700 = sand.u32 %s244, 1
        %s1701 = smul.addr %s1700, 16
        %s1702 = scalar_lea.vmem [#allocation13], %s1701
        %s1703 = sand.u32 %s37, 1
        %s1704 = scalar_lea.sflag [#allocation15], %s1703
        %s1705 = sand.u32 %s272, 1
        %s1706 = smul.addr %s1705, 256
        %s1707 = scalar_lea.vmem [#allocation14], %s1706
        %s1708 = sand.u32 %s37, 1
        %s1709 = scalar_lea.sflag [#allocation15], %s1708
        %s1710 = sand.u32 %s300, 1
        %s1711 = smul.addr %s1710, 16
        %s1712 = scalar_lea.vmem [#allocation16], %s1711
        // Predicated region
        $region73: #{tpu_custom_call.1} parent=47 // pred_check
          %p1713 = pneg %p254
        $region74: #{tpu_custom_call.1} parent=47 // pred_check_branch
          %1715 = sbr.rel (%p1713) target = $region76
        $region75: #{tpu_custom_call.1} parent=47 // pred_region
          %s1716 = smul.u32 2, %s42
          %s1718 = ssub.s32 256, 256
          %1719 = vsyncadd %s1699, %s1718
          %s1720 = smul.addr %s41, 2
          %s1721 = sadd.s32 %s1716, %s1720
          %s1722 = smul.addr %s1721, 128
          %s1723 = scalar_lea.hbm %s7, %s1722
          %s1725 = sshll.u32 %s1702, 4
          %s1726 = int_to_ptr.vmem [resolvable:$true] %s1725
          %1728 = dma.vmem_to_hbm [thread:$0]  %s1726, 256, %s1723, %s1699
        $region76: #{tpu_custom_call.1} parent=47 // pred_fallthru
          _
        // Predicated region
        $region77: #{tpu_custom_call.1} parent=47 // pred_check
          %p1729 = pneg %p282
        $region78: #{tpu_custom_call.1} parent=47 // pred_check_branch
          %1731 = sbr.rel (%p1729) target = $region80
        $region79: #{tpu_custom_call.1} parent=47 // pred_region
          %s1732 = smul.u32 32, %s42
          %s1734 = ssub.s32 4096, 4096
          %1735 = vsyncadd %s1704, %s1734
          %s1736 = smul.addr %s1732, 2
          %s1737 = smul.addr %s41, 64
          %s1738 = sadd.s32 %s1736, %s1737
          %s1739 = smul.addr %s1738, 64
          %s1740 = scalar_lea.hbm %s8, %s1739
          %s1741 = sshll.u32 %s1707, 4
          %s1742 = int_to_ptr.vmem [resolvable:$true] %s1741
          %1747 = dma.vmem_to_hbm [thread:$0]  %s1742, 4096, %s1740, %s1704, 128, 128, 8
        $region80: #{tpu_custom_call.1} parent=47 // pred_fallthru
          _
        // Predicated region
        $region81: #{tpu_custom_call.1} parent=47 // pred_check
          %p1748 = pneg %p310
        $region82: #{tpu_custom_call.1} parent=47 // pred_check_branch
          %1750 = sbr.rel (%p1748) target = $region84
        $region83: #{tpu_custom_call.1} parent=47 // pred_region
          %s1751 = smul.u32 2, %s42
          %s1753 = ssub.s32 256, 256
          %1754 = vsyncadd %s1709, %s1753
          %s1755 = smul.addr %s41, 2
          %s1756 = sadd.s32 %s1751, %s1755
          %s1757 = smul.addr %s1756, 128
          %s1758 = scalar_lea.hbm %s9, %s1757
          %s1760 = sshll.u32 %s1712, 4
          %s1761 = int_to_ptr.vmem [resolvable:$true] %s1760
          %1763 = dma.vmem_to_hbm [thread:$0]  %s1761, 256, %s1758, %s1709
        $region84: #{tpu_custom_call.1} parent=47 // pred_fallthru
          _
      $region48: #{tpu_custom_call.1} parent=5 // pred_fallthru
        _
      %p1764 = scmp.le.s32.totalorder 2, %s32
      // Predicated region
      $region85: #{tpu_custom_call.1} parent=5 // pred_check
        %p1765 = pneg %p1764
      $region86: #{tpu_custom_call.1} parent=5 // pred_check_branch
        %1767 = sbr.rel (%p1765) target = $region88
      $region87: #{tpu_custom_call.1} parent=5 // pred_region
        %s1768 = ssub.s32 %s32, 2
        // Predicated region
        $region89: #{tpu_custom_call.1} parent=87 // pred_check
          %p1769 = pneg %p260
        $region90: #{tpu_custom_call.1} parent=87 // pred_check_branch
          %1771 = sbr.rel (%p1769) target = $region92
        $region91: #{tpu_custom_call.1} parent=87 // pred_region
          %s1772 = sand.u32 %s245, 1
          %s1773 = scalar_lea.sflag [#allocation4], %s1772
          %s1774 = sand.u32 %s245, 1
          %s1775 = smul.addr %s1774, 16
          %s1776 = scalar_lea.vmem [#allocation13], %s1775
          %1777 = dma.done %s1773, 256
        $region92: #{tpu_custom_call.1} parent=87 // pred_fallthru
          _
        // Predicated region
        $region93: #{tpu_custom_call.1} parent=87 // pred_check
          %p1778 = pneg %p288
        $region94: #{tpu_custom_call.1} parent=87 // pred_check_branch
          %1780 = sbr.rel (%p1778) target = $region96
        $region95: #{tpu_custom_call.1} parent=87 // pred_region
          %s1781 = sand.u32 %s38, 1
          %s1782 = scalar_lea.sflag [#allocation15], %s1781
          %s1783 = sand.u32 %s273, 1
          %s1784 = smul.addr %s1783, 256
          %s1785 = scalar_lea.vmem [#allocation14], %s1784
          %1786 = dma.done %s1782, 4096
        $region96: #{tpu_custom_call.1} parent=87 // pred_fallthru
          _
        // Predicated region
        $region97: #{tpu_custom_call.1} parent=87 // pred_check
          %p1787 = pneg %p316
        $region98: #{tpu_custom_call.1} parent=87 // pred_check_branch
          %1789 = sbr.rel (%p1787) target = $region100
        $region99: #{tpu_custom_call.1} parent=87 // pred_region
          %s1790 = sand.u32 %s38, 1
          %s1791 = scalar_lea.sflag [#allocation15], %s1790
          %s1792 = sand.u32 %s301, 1
          %s1793 = smul.addr %s1792, 16
          %s1794 = scalar_lea.vmem [#allocation16], %s1793
          %1795 = dma.done %s1791, 256
        $region100: #{tpu_custom_call.1} parent=87 // pred_fallthru
          _
      $region88: #{tpu_custom_call.1} parent=5 // pred_fallthru
        _
    $region6: #{tpu_custom_call.1} parent=1 // loop_footer
      %s36 = sadd.s32 1, %s32
    $region7: #{tpu_custom_call.1} parent=1 // loop_footer_branch
      %31 = sbr.rel target = $region3
    $region8: #{tpu_custom_call.1} parent=1 // loop_exit
      _
    %1796 = vsyncpa [#allocation3], 1
    %s1797 = scalar_lea.sflag [#allocation3], 1
    %1798 = vsyncpa %s1797, 1
    %1799 = vsyncpa [#allocation8], 1
    %s1800 = scalar_lea.sflag [#allocation8], 1
    %1801 = vsyncpa %s1800, 1
    %1802 = vsyncpa [#allocation11], 1
    %s1803 = scalar_lea.sflag [#allocation11], 1
    %1804 = vsyncpa %s1803, 1
    %1805 = vsyncpa [#allocation4], 1
    %s1806 = scalar_lea.sflag [#allocation4], 1
    %1807 = vsyncpa %s1806, 1
    %1808 = vsyncpa [#allocation15], 1
    %s1809 = scalar_lea.sflag [#allocation15], 1
    %1810 = vsyncpa %s1809, 1
    %1811 = vsyncpa [#allocation5], 1
    %s1812 = scalar_lea.sflag [#allocation5], 1
    %1813 = vsyncpa %s1812, 1

</llo_original>
